<compile_context>
chip_gen: v7x
topology: tpu7x:2x2x1
jax: 0.10.0
libtpu: 0.0.40
codegen_flags: <defaults>
</compile_context>

<pallas_src>
import functools

import jax
import jax.numpy as jnp
from jax.experimental import pallas as pl
from jax.experimental.pallas import tpu as pltpu

# Logical sizes (PyTorch module) and lane-aligned padded sizes.
IN_F = 28 * 28                   # 784 (kept un-padded: contraction dim only)
H1, H1_PAD = 312, 384            # 312 -> 3*128
H2 = 256                         # already 2*128
OUT, OUT_PAD = 10, 128           # 10  -> 1*128


def mlp_kernel(x_ref, w1_ref, b1_ref, w2_ref, b2_ref, w3_ref, b3_ref, o_ref):
    # Cast x to bf16 in VMEM (avoids a separate XLA pad/cast pass over HBM).
    xb = x_ref[...].astype(jnp.bfloat16)
    # Layer 1: Linear(784 -> 384) + ReLU   (true width 312, zero-padded)
    h1 = jnp.dot(xb, w1_ref[...], preferred_element_type=jnp.float32)
    h1 = jnp.maximum(h1 + b1_ref[...], 0.0).astype(jnp.bfloat16)
    # Layer 2: Linear(384 -> 256) + ReLU   (true width 312 -> 256)
    h2 = jnp.dot(h1, w2_ref[...], preferred_element_type=jnp.float32)
    h2 = jnp.maximum(h2 + b2_ref[...], 0.0).astype(jnp.bfloat16)
    # Layer 3: Linear(256 -> 128), no activation (true width 10, zero-padded)
    out = jnp.dot(h2, w3_ref[...], preferred_element_type=jnp.float32)
    o_ref[...] = (out + b3_ref[...]).astype(o_ref.dtype)   # bf16 writeback


def _pad_to(a, shape):
    return jnp.pad(a, [(0, t - s) for s, t in zip(a.shape, shape)])


def _round_up(x, m):
    return (x + m - 1) // m * m


def prepare_params(params):
    """Zero-pad N/feature dims to lane multiples, cast weights to bf16 (once)."""
    return {
        "w1": _pad_to(params["w1"], (IN_F, H1_PAD)).astype(jnp.bfloat16),
        "b1": _pad_to(params["b1"], (1, H1_PAD)).astype(jnp.float32),
        "w2": _pad_to(params["w2"], (H1_PAD, H2)).astype(jnp.bfloat16),
        "b2": params["b2"].astype(jnp.float32),
        "w3": _pad_to(params["w3"], (H2, OUT_PAD)).astype(jnp.bfloat16),
        "b3": _pad_to(params["b3"], (1, OUT_PAD)).astype(jnp.float32),
    }


def _choose_tm(batch, tm_max):
    """Batch tile: big enough to amortize per-step overhead, but always
    leaving >=2 grid steps for moderate batches so v7x's 2 TCs both work."""
    if batch <= 16:
        return _round_up(max(batch, 8), 8)
    return max(8, min(tm_max, _round_up(pl.cdiv(batch, 2), 8)))


@functools.partial(jax.jit, static_argnames=("tm",))
def neural_network_forward(x_nchw, padded_params, *, tm=512):
    """Forward pass matching NeuralNetwork.forward; returns (B, 10) f32 logits."""
    B = x_nchw.shape[0]
    x = x_nchw.reshape(B, -1).astype(jnp.float32)   # Flatten -> (B, 784), f32

    TM = _choose_tm(B, tm)
    if B < TM:                                      # tiny-batch path only
        x = jnp.pad(x, ((0, TM - B), (0, 0)))
    rows = max(B, TM)
    grid = pl.cdiv(rows, TM)                        # partial tail block is OK

    p = padded_params
    resident = lambda a: pl.BlockSpec(a.shape, lambda i: (0, 0))  # VMEM-resident

    weight_bytes = sum(v.size * v.dtype.itemsize for v in p.values())
    cost = pl.CostEstimate(
        flops=2 * B * (IN_F * H1 + H1 * H2 + H2 * OUT),
        transcendentals=0,
        bytes_accessed=rows * IN_F * 4 + weight_bytes + rows * OUT_PAD * 2,
    )

    out = pl.pallas_call(
        mlp_kernel,
        out_shape=jax.ShapeDtypeStruct((rows, OUT_PAD), jnp.bfloat16),
        grid=(grid,),
        in_specs=[
            pl.BlockSpec((TM, IN_F), lambda i: (i, 0)),   # 784 == full dim: legal
            resident(p["w1"]), resident(p["b1"]),
            resident(p["w2"]), resident(p["b2"]),
            resident(p["w3"]), resident(p["b3"]),
        ],
        out_specs=pl.BlockSpec((TM, OUT_PAD), lambda i: (i, 0)),
        compiler_params=pltpu.CompilerParams(
            dimension_semantics=("parallel",)),
        cost_estimate=cost,
    )(x, p["w1"], p["b1"], p["w2"], p["b2"], p["w3"], p["b3"])

    return out[:B, :OUT].astype(jnp.float32)


def init_params(key):
    k1, k2, k3, k4, k5, k6 = jax.random.split(key, 6)
    # Deterministic synthetic init (uniform, PyTorch-Linear-style bounds).
    def uinit(k, shape, fan_in):
        bound = 1.0 / jnp.sqrt(fan_in)
        return jax.random.uniform(k, shape, jnp.float32, -bound, bound)

    return {
        "w1": uinit(k1, (IN_F, H1), IN_F),
        "b1": uinit(k2, (1, H1), IN_F),
        "w2": uinit(k3, (H1, H2), H1),
        "b2": uinit(k4, (1, H2), H1),
        "w3": uinit(k5, (H2, OUT), H2),
        "b3": uinit(k6, (1, OUT), H2),
    }


if __name__ == "__main__":
    key = jax.random.PRNGKey(0)
    pkey, xkey = jax.random.split(key)
    params = init_params(pkey)
    padded = prepare_params(params)

    # Small batch of MNIST-shaped inputs (NCHW), like the PyTorch module.
    x = jax.random.normal(xkey, (8, 1, 28, 28), dtype=jnp.float32)

    logits = neural_network_forward(x, padded)
    logits = jax.block_until_ready(logits)

    # Reference with the same bf16 weight/activation quantization, f32 accum.
    xb = x.reshape(x.shape[0], -1).astype(jnp.bfloat16)
    w1b = params["w1"].astype(jnp.bfloat16)
    w2b = params["w2"].astype(jnp.bfloat16)
    w3b = params["w3"].astype(jnp.bfloat16)
    h1 = jnp.maximum(
        jnp.dot(xb, w1b, preferred_element_type=jnp.float32) + params["b1"],
        0.0).astype(jnp.bfloat16)
    h2 = jnp.maximum(
        jnp.dot(h1, w2b, preferred_element_type=jnp.float32) + params["b2"],
        0.0).astype(jnp.bfloat16)
    ref = jnp.dot(h2, w3b, preferred_element_type=jnp.float32) + params["b3"]

    assert logits.shape == (8, 10)
    assert jnp.allclose(logits, ref, atol=2e-2, rtol=2e-2), (
        float(jnp.max(jnp.abs(logits - ref))))

    print("KERNEL_OK")
</pallas_src>

<mosaic_0001>
module attributes {stable_mosaic.version = 11 : i64} {
  func.func @mlp_kernel(%arg0: i32, %arg1: memref<8x784xf32, #tpu.memory_space<vmem>>, %arg2: memref<784x384xbf16, #tpu.memory_space<vmem>>, %arg3: memref<1x384xf32, #tpu.memory_space<vmem>>, %arg4: memref<384x256xbf16, #tpu.memory_space<vmem>>, %arg5: memref<1x256xf32, #tpu.memory_space<vmem>>, %arg6: memref<256x128xbf16, #tpu.memory_space<vmem>>, %arg7: memref<1x128xf32, #tpu.memory_space<vmem>>, %arg8: memref<8x128xbf16, #tpu.memory_space<vmem>>) attributes {dimension_semantics = [#tpu.dimension_semantics<parallel>], iteration_bounds = array<i64: 1>, scalar_prefetch = 0 : i64, scratch_operands = 0 : i64, tpu.core_type = #tpu.core_type<tc>, window_params = [{transform_indices = @transform_0, window_bounds = array<i64: 8, 784>}, {pipeline_mode = #tpu.pipeline_mode<synchronous>, transform_indices = @transform_1, window_bounds = array<i64: 784, 384>}, {pipeline_mode = #tpu.pipeline_mode<synchronous>, transform_indices = @transform_2, window_bounds = array<i64: 1, 384>}, {pipeline_mode = #tpu.pipeline_mode<synchronous>, transform_indices = @transform_3, window_bounds = array<i64: 384, 256>}, {pipeline_mode = #tpu.pipeline_mode<synchronous>, transform_indices = @transform_4, window_bounds = array<i64: 1, 256>}, {pipeline_mode = #tpu.pipeline_mode<synchronous>, transform_indices = @transform_5, window_bounds = array<i64: 256, 128>}, {pipeline_mode = #tpu.pipeline_mode<synchronous>, transform_indices = @transform_6, window_bounds = array<i64: 1, 128>}, {transform_indices = @transform_7, window_bounds = array<i64: 8, 128>}]} {
    %c0 = arith.constant 0 : index
    %c0_0 = arith.constant 0 : index
    %0 = vector.load %arg1[%c0, %c0_0] : memref<8x784xf32, #tpu.memory_space<vmem>>, vector<8x784xf32>
    %1 = arith.truncf %0 : vector<8x784xf32> to vector<8x784xbf16>
    %c0_1 = arith.constant 0 : index
    %c0_2 = arith.constant 0 : index
    %2 = vector.load %arg2[%c0_1, %c0_2] : memref<784x384xbf16, #tpu.memory_space<vmem>>, vector<784x384xbf16>
    %cst = arith.constant dense<0.000000e+00> : vector<8x384xf32>
    %3 = tpu.matmul %1, %2, %cst {dimension_numbers = #tpu.dot_dimension_numbers<[1], [0], [0], [1], [0, 0, 1, 1], [], []>} : vector<8x784xbf16>, vector<784x384xbf16>, vector<8x384xf32> -> vector<8x384xf32>
    %c0_3 = arith.constant 0 : index
    %c0_4 = arith.constant 0 : index
    %4 = vector.load %arg3[%c0_3, %c0_4] : memref<1x384xf32, #tpu.memory_space<vmem>>, vector<1x384xf32>
    %5 = vector.broadcast %4 : vector<1x384xf32> to vector<8x384xf32>
    %6 = arith.addf %3, %5 : vector<8x384xf32>
    %cst_5 = arith.constant 0.000000e+00 : f32
    %7 = vector.broadcast %cst_5 : f32 to vector<8x384xf32>
    %8 = arith.maximumf %6, %7 : vector<8x384xf32>
    %9 = arith.truncf %8 : vector<8x384xf32> to vector<8x384xbf16>
    %c0_6 = arith.constant 0 : index
    %c0_7 = arith.constant 0 : index
    %10 = vector.load %arg4[%c0_6, %c0_7] : memref<384x256xbf16, #tpu.memory_space<vmem>>, vector<384x256xbf16>
    %cst_8 = arith.constant dense<0.000000e+00> : vector<8x256xf32>
    %11 = tpu.matmul %9, %10, %cst_8 {dimension_numbers = #tpu.dot_dimension_numbers<[1], [0], [0], [1], [0, 0, 1, 1], [], []>} : vector<8x384xbf16>, vector<384x256xbf16>, vector<8x256xf32> -> vector<8x256xf32>
    %c0_9 = arith.constant 0 : index
    %c0_10 = arith.constant 0 : index
    %12 = vector.load %arg5[%c0_9, %c0_10] : memref<1x256xf32, #tpu.memory_space<vmem>>, vector<1x256xf32>
    %13 = vector.broadcast %12 : vector<1x256xf32> to vector<8x256xf32>
    %14 = arith.addf %11, %13 : vector<8x256xf32>
    %cst_11 = arith.constant 0.000000e+00 : f32
    %15 = vector.broadcast %cst_11 : f32 to vector<8x256xf32>
    %16 = arith.maximumf %14, %15 : vector<8x256xf32>
    %17 = arith.truncf %16 : vector<8x256xf32> to vector<8x256xbf16>
    %c0_12 = arith.constant 0 : index
    %c0_13 = arith.constant 0 : index
    %18 = vector.load %arg6[%c0_12, %c0_13] : memref<256x128xbf16, #tpu.memory_space<vmem>>, vector<256x128xbf16>
    %cst_14 = arith.constant dense<0.000000e+00> : vector<8x128xf32>
    %19 = tpu.matmul %17, %18, %cst_14 {dimension_numbers = #tpu.dot_dimension_numbers<[1], [0], [0], [1], [0, 0, 1, 1], [], []>} : vector<8x256xbf16>, vector<256x128xbf16>, vector<8x128xf32> -> vector<8x128xf32>
    %c0_15 = arith.constant 0 : index
    %c0_16 = arith.constant 0 : index
    %20 = vector.load %arg7[%c0_15, %c0_16] : memref<1x128xf32, #tpu.memory_space<vmem>>, vector<1x128xf32>
    %21 = vector.broadcast %20 : vector<1x128xf32> to vector<8x128xf32>
    %22 = arith.addf %19, %21 : vector<8x128xf32>
    %23 = arith.truncf %22 : vector<8x128xf32> to vector<8x128xbf16>
    %c0_17 = arith.constant 0 : index
    %c0_18 = arith.constant 0 : index
    %24 = vector.load %arg8[%c0_17, %c0_18] : memref<8x128xbf16, #tpu.memory_space<vmem>>, vector<8x128xbf16>
    tpu.vector_store %arg8[%c0_17, %c0_18], %23 {strides = array<i32>} : memref<8x128xbf16, #tpu.memory_space<vmem>>, vector<8x128xbf16>,
    return
  }
  func.func @transform_0(%arg0: i32) -> (i32, i32) {
    %c0_i32 = arith.constant 0 : i32
    %c0_i32_0 = arith.constant 0 : i32
    return %arg0, %c0_i32 : i32, i32
  }
  func.func @transform_1(%arg0: i32) -> (i32, i32) {
    %c0_i32 = arith.constant 0 : i32
    %c0_i32_0 = arith.constant 0 : i32
    %c0_i32_1 = arith.constant 0 : i32
    return %c0_i32, %c0_i32_0 : i32, i32
  }
  func.func @transform_2(%arg0: i32) -> (i32, i32) {
    %c0_i32 = arith.constant 0 : i32
    %c0_i32_0 = arith.constant 0 : i32
    %c0_i32_1 = arith.constant 0 : i32
    return %c0_i32, %c0_i32_0 : i32, i32
  }
  func.func @transform_3(%arg0: i32) -> (i32, i32) {
    %c0_i32 = arith.constant 0 : i32
    %c0_i32_0 = arith.constant 0 : i32
    %c0_i32_1 = arith.constant 0 : i32
    return %c0_i32, %c0_i32_0 : i32, i32
  }
  func.func @transform_4(%arg0: i32) -> (i32, i32) {
    %c0_i32 = arith.constant 0 : i32
    %c0_i32_0 = arith.constant 0 : i32
    %c0_i32_1 = arith.constant 0 : i32
    return %c0_i32, %c0_i32_0 : i32, i32
  }
  func.func @transform_5(%arg0: i32) -> (i32, i32) {
    %c0_i32 = arith.constant 0 : i32
    %c0_i32_0 = arith.constant 0 : i32
    %c0_i32_1 = arith.constant 0 : i32
    return %c0_i32, %c0_i32_0 : i32, i32
  }
  func.func @transform_6(%arg0: i32) -> (i32, i32) {
    %c0_i32 = arith.constant 0 : i32
    %c0_i32_0 = arith.constant 0 : i32
    %c0_i32_1 = arith.constant 0 : i32
    return %c0_i32, %c0_i32_0 : i32, i32
  }
  func.func @transform_7(%arg0: i32) -> (i32, i32) {
    %c0_i32 = arith.constant 0 : i32
    %c0_i32_0 = arith.constant 0 : i32
    return %arg0, %c0_i32 : i32, i32
  }
}

</mosaic_0001>

<llo_original>
// kernel: neural_network_forward.1
$region0: #{neural_network_forward.1}
  #allocation0 [shape = 'u32[]', space=smem, size = 0x4, offset = 0x4, fixed_abs, tag = 'smem constant byte address 0x4 - core index']
  #allocation1 [shape = 'u32[144,128]{1,0:T(1,128)}', space=vmem, size = 0x12000, scoped, tag = 'internal scratch']
  %s0 = inlined_call_operand.vmem [shape: f32[8,784], index: 0, kind: input, shape index: {}]
  %s1 = inlined_call_operand.hbm [shape: bf16[784,384], index: 1, kind: input, shape index: {}]
  %s2 = inlined_call_operand.vmem [shape: f32[1,384], index: 2, kind: input, shape index: {}]
  %s3 = inlined_call_operand.vmem [shape: bf16[384,256], index: 3, kind: input, shape index: {}]
  %s4 = inlined_call_operand.vmem [shape: f32[1,256], index: 4, kind: input, shape index: {}]
  %s5 = inlined_call_operand.vmem [shape: bf16[256,128], index: 5, kind: input, shape index: {}]
  %s6 = inlined_call_operand.vmem [shape: f32[1,128], index: 6, kind: input, shape index: {}]
  %s7 = inlined_call_operand.vmem [shape: bf16[8,128], index: 7, kind: output, shape index: {}]
  %s8 = sld [smem:[#allocation0]]
  $region42: #{neural_network_forward.1} parent=0
    _
  %s10 = ssub.s32 1, %s8
  %s11 = scalar_select 0, %s10, %s8
  $region1: #{neural_network_forward.1} parent=0
    #allocation2 [shape = 'u8[602112]{0}', space=vmem, size = 0x93000, scoped, tag = 'input window, operand 1, single buffered']
    #allocation3 [shape = 's32[1]{0}', space=sflag, size = 0x4, scoped, tag = 'scoped memory for neural_network_forward.1']
    %12 = vsyncpa [#allocation3], 0
    // Predicated region
    $region2: #{neural_network_forward.1} parent=1 // pred_check
      _
    $region3: #{neural_network_forward.1} parent=1 // pred_check_branch
      %14 = sbr.rel (0) target = $region5
    $region4: #{neural_network_forward.1} parent=1 // pred_region
      _
    $region5: #{neural_network_forward.1} parent=1 // pred_fallthru
      _
    // Predicated region
    $region6: #{neural_network_forward.1} parent=1 // pred_check
      _
    $region7: #{neural_network_forward.1} parent=1 // pred_check_branch
      %16 = sbr.rel (0) target = $region9
    $region8: #{neural_network_forward.1} parent=1 // pred_region
      %s18 = ssub.s32 18816, 18816
      %19 = vsyncadd [#allocation3], %s18
      %s20 = sshll.u32 [#allocation2], 4
      %s21 = int_to_ptr.vmem [resolvable:$true] %s20
      %26 = dma.hbm_to_vmem [thread:$0]  %s1, 18816, %s21, [#allocation3], 192, 192, 12
    $region9: #{neural_network_forward.1} parent=1 // pred_fallthru
      _
    // Predicated region
    $region10: #{neural_network_forward.1} parent=1 // pred_check
      _
    $region11: #{neural_network_forward.1} parent=1 // pred_check_branch
      %28 = sbr.rel (0) target = $region13
    $region12: #{neural_network_forward.1} parent=1 // pred_region
      _
    $region13: #{neural_network_forward.1} parent=1 // pred_fallthru
      _
    // Predicated region
    $region14: #{neural_network_forward.1} parent=1 // pred_check
      _
    $region15: #{neural_network_forward.1} parent=1 // pred_check_branch
      %30 = sbr.rel (0) target = $region17
    $region16: #{neural_network_forward.1} parent=1 // pred_region
      _
    $region17: #{neural_network_forward.1} parent=1 // pred_fallthru
      _
    // Predicated region
    $region18: #{neural_network_forward.1} parent=1 // pred_check
      _
    $region19: #{neural_network_forward.1} parent=1 // pred_check_branch
      %32 = sbr.rel (0) target = $region21
    $region20: #{neural_network_forward.1} parent=1 // pred_region
      _
    $region21: #{neural_network_forward.1} parent=1 // pred_fallthru
      _
    // Predicated region
    $region22: #{neural_network_forward.1} parent=1 // pred_check
      _
    $region23: #{neural_network_forward.1} parent=1 // pred_check_branch
      %34 = sbr.rel (0) target = $region25
    $region24: #{neural_network_forward.1} parent=1 // pred_region
      _
    $region25: #{neural_network_forward.1} parent=1 // pred_fallthru
      _
    // Predicated region
    $region26: #{neural_network_forward.1} parent=1 // pred_check
      _
    $region27: #{neural_network_forward.1} parent=1 // pred_check_branch
      %36 = sbr.rel (0) target = $region29
    $region28: #{neural_network_forward.1} parent=1 // pred_region
      _
    $region29: #{neural_network_forward.1} parent=1 // pred_fallthru
      _
    // Predicated region
    $region30: #{neural_network_forward.1} parent=1 // pred_check
      _
    $region31: #{neural_network_forward.1} parent=1 // pred_check_branch
      %38 = sbr.rel (0) target = $region33
    $region32: #{neural_network_forward.1} parent=1 // pred_region
      %39 = dma.done [#allocation3], 18816
    $region33: #{neural_network_forward.1} parent=1 // pred_fallthru
      _
    %v41 = vld [vmem:[%s0] sm:$0xff]
    %v42 = vld [vmem:[%s0 + $0x8] sm:$0xff]
    %v43 = vld [vmem:[%s0 + $0x10] sm:$0xff]
    %v44 = vld [vmem:[%s0 + $0x18] sm:$0xff]
    %v45 = vld [vmem:[%s0 + $0x20] sm:$0xff]
    %v46 = vld [vmem:[%s0 + $0x28] sm:$0xff]
    %v47 = vld [vmem:[%s0 + $0x30] sm:$0xff]
    %v48 = vpack.c.bf16 %v41, %v41
    %v49 = vpack.c.bf16 %v42, %v42
    %v50 = vpack.c.bf16 %v43, %v43
    %v51 = vpack.c.bf16 %v44, %v44
    %v52 = vpack.c.bf16 %v45, %v45
    %v53 = vpack.c.bf16 %v46, %v46
    %v54 = vpack.c.bf16 %v47, %v47
    %v55 = vld [vmem:[#allocation2] sm:$0xff]
    %v56 = vld [vmem:[#allocation2 + $0x8] sm:$0xf]
    %v57 = vld [vmem:[#allocation2 + $0xc] sm:$0xff]
    %v58 = vld [vmem:[#allocation2 + $0x14] sm:$0xf]
    %v59 = vld [vmem:[#allocation2 + $0x18] sm:$0xff]
    %v60 = vld [vmem:[#allocation2 + $0x20] sm:$0xf]
    %v61 = vld [vmem:[#allocation2 + $0x24] sm:$0xff]
    %v62 = vld [vmem:[#allocation2 + $0x2c] sm:$0xf]
    %v63 = vld [vmem:[#allocation2 + $0x30] sm:$0xff]
    %v64 = vld [vmem:[#allocation2 + $0x38] sm:$0xf]
    %v65 = vld [vmem:[#allocation2 + $0x3c] sm:$0xff]
    %v66 = vld [vmem:[#allocation2 + $0x44] sm:$0xf]
    %v67 = vld [vmem:[#allocation2 + $0x48] sm:$0xff]
    %v68 = vld [vmem:[#allocation2 + $0x50] sm:$0xf]
    %v69 = vld [vmem:[#allocation2 + $0x54] sm:$0xff]
    %v70 = vld [vmem:[#allocation2 + $0x5c] sm:$0xf]
    %v71 = vld [vmem:[#allocation2 + $0x60] sm:$0xff]
    %v72 = vld [vmem:[#allocation2 + $0x68] sm:$0xf]
    %v73 = vld [vmem:[#allocation2 + $0x6c] sm:$0xff]
    %v74 = vld [vmem:[#allocation2 + $0x74] sm:$0xf]
    %v75 = vld [vmem:[#allocation2 + $0x78] sm:$0xff]
    %v76 = vld [vmem:[#allocation2 + $0x80] sm:$0xf]
    %v77 = vld [vmem:[#allocation2 + $0x84] sm:$0xff]
    %v78 = vld [vmem:[#allocation2 + $0x8c] sm:$0xf]
    %v79 = vld [vmem:[#allocation2 + $0x90] sm:$0xff]
    %v80 = vld [vmem:[#allocation2 + $0x98] sm:$0xf]
    %v81 = vld [vmem:[#allocation2 + $0x9c] sm:$0xff]
    %v82 = vld [vmem:[#allocation2 + $0xa4] sm:$0xf]
    %v83 = vld [vmem:[#allocation2 + $0xa8] sm:$0xff]
    %v84 = vld [vmem:[#allocation2 + $0xb0] sm:$0xf]
    %v85 = vld [vmem:[#allocation2 + $0xb4] sm:$0xff]
    %v86 = vld [vmem:[#allocation2 + $0xbc] sm:$0xf]
    %v87 = vld [vmem:[#allocation2 + $0xc0] sm:$0xff]
    %v88 = vld [vmem:[#allocation2 + $0xc8] sm:$0xf]
    %v89 = vld [vmem:[#allocation2 + $0xcc] sm:$0xff]
    %v90 = vld [vmem:[#allocation2 + $0xd4] sm:$0xf]
    %v91 = vld [vmem:[#allocation2 + $0xd8] sm:$0xff]
    %v92 = vld [vmem:[#allocation2 + $0xe0] sm:$0xf]
    %v93 = vld [vmem:[#allocation2 + $0xe4] sm:$0xff]
    %v94 = vld [vmem:[#allocation2 + $0xec] sm:$0xf]
    %v95 = vld [vmem:[#allocation2 + $0xf0] sm:$0xff]
    %v96 = vld [vmem:[#allocation2 + $0xf8] sm:$0xf]
    %v97 = vld [vmem:[#allocation2 + $0xfc] sm:$0xff]
    %v98 = vld [vmem:[#allocation2 + $0x104] sm:$0xf]
    %v99 = vld [vmem:[#allocation2 + $0x108] sm:$0xff]
    %v100 = vld [vmem:[#allocation2 + $0x110] sm:$0xf]
    %v101 = vld [vmem:[#allocation2 + $0x114] sm:$0xff]
    %v102 = vld [vmem:[#allocation2 + $0x11c] sm:$0xf]
    %v103 = vld [vmem:[#allocation2 + $0x120] sm:$0xff]
    %v104 = vld [vmem:[#allocation2 + $0x128] sm:$0xf]
    %v105 = vld [vmem:[#allocation2 + $0x12c] sm:$0xff]
    %v106 = vld [vmem:[#allocation2 + $0x134] sm:$0xf]
    %v107 = vld [vmem:[#allocation2 + $0x138] sm:$0xff]
    %v108 = vld [vmem:[#allocation2 + $0x140] sm:$0xf]
    %v109 = vld [vmem:[#allocation2 + $0x144] sm:$0xff]
    %v110 = vld [vmem:[#allocation2 + $0x14c] sm:$0xf]
    %v111 = vld [vmem:[#allocation2 + $0x150] sm:$0xff]
    %v112 = vld [vmem:[#allocation2 + $0x158] sm:$0xf]
    %v113 = vld [vmem:[#allocation2 + $0x15c] sm:$0xff]
    %v114 = vld [vmem:[#allocation2 + $0x164] sm:$0xf]
    %v115 = vld [vmem:[#allocation2 + $0x168] sm:$0xff]
    %v116 = vld [vmem:[#allocation2 + $0x170] sm:$0xf]
    %v117 = vld [vmem:[#allocation2 + $0x174] sm:$0xff]
    %v118 = vld [vmem:[#allocation2 + $0x17c] sm:$0xf]
    %v119 = vld [vmem:[#allocation2 + $0x180] sm:$0xff]
    %v120 = vld [vmem:[#allocation2 + $0x188] sm:$0xf]
    %v121 = vld [vmem:[#allocation2 + $0x18c] sm:$0xff]
    %v122 = vld [vmem:[#allocation2 + $0x194] sm:$0xf]
    %v123 = vld [vmem:[#allocation2 + $0x198] sm:$0xff]
    %v124 = vld [vmem:[#allocation2 + $0x1a0] sm:$0xf]
    %v125 = vld [vmem:[#allocation2 + $0x1a4] sm:$0xff]
    %v126 = vld [vmem:[#allocation2 + $0x1ac] sm:$0xf]
    %v127 = vld [vmem:[#allocation2 + $0x1b0] sm:$0xff]
    %v128 = vld [vmem:[#allocation2 + $0x1b8] sm:$0xf]
    %v129 = vld [vmem:[#allocation2 + $0x1bc] sm:$0xff]
    %v130 = vld [vmem:[#allocation2 + $0x1c4] sm:$0xf]
    %v131 = vld [vmem:[#allocation2 + $0x1c8] sm:$0xff]
    %v132 = vld [vmem:[#allocation2 + $0x1d0] sm:$0xf]
    %v133 = vld [vmem:[#allocation2 + $0x1d4] sm:$0xff]
    %v134 = vld [vmem:[#allocation2 + $0x1dc] sm:$0xf]
    %v135 = vld [vmem:[#allocation2 + $0x1e0] sm:$0xff]
    %v136 = vld [vmem:[#allocation2 + $0x1e8] sm:$0xf]
    %v137 = vld [vmem:[#allocation2 + $0x1ec] sm:$0xff]
    %v138 = vld [vmem:[#allocation2 + $0x1f4] sm:$0xf]
    %v139 = vld [vmem:[#allocation2 + $0x1f8] sm:$0xff]
    %v140 = vld [vmem:[#allocation2 + $0x200] sm:$0xf]
    %v141 = vld [vmem:[#allocation2 + $0x204] sm:$0xff]
    %v142 = vld [vmem:[#allocation2 + $0x20c] sm:$0xf]
    %v143 = vld [vmem:[#allocation2 + $0x210] sm:$0xff]
    %v144 = vld [vmem:[#allocation2 + $0x218] sm:$0xf]
    %v145 = vld [vmem:[#allocation2 + $0x21c] sm:$0xff]
    %v146 = vld [vmem:[#allocation2 + $0x224] sm:$0xf]
    %v147 = vld [vmem:[#allocation2 + $0x228] sm:$0xff]
    %v148 = vld [vmem:[#allocation2 + $0x230] sm:$0xf]
    %v149 = vld [vmem:[#allocation2 + $0x234] sm:$0xff]
    %v150 = vld [vmem:[#allocation2 + $0x23c] sm:$0xf]
    %v151 = vld [vmem:[#allocation2 + $0x240] sm:$0xff]
    %v152 = vld [vmem:[#allocation2 + $0x248] sm:$0xf]
    %v153 = vld [vmem:[#allocation2 + $0x24c] sm:$0xff]
    %v154 = vld [vmem:[#allocation2 + $0x254] sm:$0xf]
    %v155 = vld [vmem:[#allocation2 + $0x258] sm:$0xff]
    %v156 = vld [vmem:[#allocation2 + $0x260] sm:$0xf]
    %v157 = vld [vmem:[#allocation2 + $0x264] sm:$0xff]
    %v158 = vld [vmem:[#allocation2 + $0x26c] sm:$0xf]
    %v159 = vld [vmem:[#allocation2 + $0x270] sm:$0xff]
    %v160 = vld [vmem:[#allocation2 + $0x278] sm:$0xf]
    %v161 = vld [vmem:[#allocation2 + $0x27c] sm:$0xff]
    %v162 = vld [vmem:[#allocation2 + $0x284] sm:$0xf]
    %v163 = vld [vmem:[#allocation2 + $0x288] sm:$0xff]
    %v164 = vld [vmem:[#allocation2 + $0x290] sm:$0xf]
    %v165 = vld [vmem:[#allocation2 + $0x294] sm:$0xff]
    %v166 = vld [vmem:[#allocation2 + $0x29c] sm:$0xf]
    %v167 = vld [vmem:[#allocation2 + $0x2a0] sm:$0xff]
    %v168 = vld [vmem:[#allocation2 + $0x2a8] sm:$0xf]
    %v169 = vld [vmem:[#allocation2 + $0x2ac] sm:$0xff]
    %v170 = vld [vmem:[#allocation2 + $0x2b4] sm:$0xf]
    %v171 = vld [vmem:[#allocation2 + $0x2b8] sm:$0xff]
    %v172 = vld [vmem:[#allocation2 + $0x2c0] sm:$0xf]
    %v173 = vld [vmem:[#allocation2 + $0x2c4] sm:$0xff]
    %v174 = vld [vmem:[#allocation2 + $0x2cc] sm:$0xf]
    %v175 = vld [vmem:[#allocation2 + $0x2d0] sm:$0xff]
    %v176 = vld [vmem:[#allocation2 + $0x2d8] sm:$0xf]
    %v177 = vld [vmem:[#allocation2 + $0x2dc] sm:$0xff]
    %v178 = vld [vmem:[#allocation2 + $0x2e4] sm:$0xf]
    %v179 = vld [vmem:[#allocation2 + $0x2e8] sm:$0xff]
    %v180 = vld [vmem:[#allocation2 + $0x2f0] sm:$0xf]
    %v181 = vld [vmem:[#allocation2 + $0x2f4] sm:$0xff]
    %v182 = vld [vmem:[#allocation2 + $0x2fc] sm:$0xf]
    %v183 = vld [vmem:[#allocation2 + $0x300] sm:$0xff]
    %v184 = vld [vmem:[#allocation2 + $0x308] sm:$0xf]
    %v185 = vld [vmem:[#allocation2 + $0x30c] sm:$0xff]
    %v186 = vld [vmem:[#allocation2 + $0x314] sm:$0xf]
    %v187 = vld [vmem:[#allocation2 + $0x318] sm:$0xff]
    %v188 = vld [vmem:[#allocation2 + $0x320] sm:$0xf]
    %v189 = vld [vmem:[#allocation2 + $0x324] sm:$0xff]
    %v190 = vld [vmem:[#allocation2 + $0x32c] sm:$0xf]
    %v191 = vld [vmem:[#allocation2 + $0x330] sm:$0xff]
    %v192 = vld [vmem:[#allocation2 + $0x338] sm:$0xf]
    %v193 = vld [vmem:[#allocation2 + $0x33c] sm:$0xff]
    %v194 = vld [vmem:[#allocation2 + $0x344] sm:$0xf]
    %v195 = vld [vmem:[#allocation2 + $0x348] sm:$0xff]
    %v196 = vld [vmem:[#allocation2 + $0x350] sm:$0xf]
    %v197 = vld [vmem:[#allocation2 + $0x354] sm:$0xff]
    %v198 = vld [vmem:[#allocation2 + $0x35c] sm:$0xf]
    %v199 = vld [vmem:[#allocation2 + $0x360] sm:$0xff]
    %v200 = vld [vmem:[#allocation2 + $0x368] sm:$0xf]
    %v201 = vld [vmem:[#allocation2 + $0x36c] sm:$0xff]
    %v202 = vld [vmem:[#allocation2 + $0x374] sm:$0xf]
    %v203 = vld [vmem:[#allocation2 + $0x378] sm:$0xff]
    %v204 = vld [vmem:[#allocation2 + $0x380] sm:$0xf]
    %v205 = vld [vmem:[#allocation2 + $0x384] sm:$0xff]
    %v206 = vld [vmem:[#allocation2 + $0x38c] sm:$0xf]
    %v207 = vld [vmem:[#allocation2 + $0x390] sm:$0xff]
    %v208 = vld [vmem:[#allocation2 + $0x398] sm:$0xf]
    %v209 = vld [vmem:[#allocation2 + $0x39c] sm:$0xff]
    %v210 = vld [vmem:[#allocation2 + $0x3a4] sm:$0xf]
    %v211 = vld [vmem:[#allocation2 + $0x3a8] sm:$0xff]
    %v212 = vld [vmem:[#allocation2 + $0x3b0] sm:$0xf]
    %v213 = vld [vmem:[#allocation2 + $0x3b4] sm:$0xff]
    %v214 = vld [vmem:[#allocation2 + $0x3bc] sm:$0xf]
    %v215 = vld [vmem:[#allocation2 + $0x3c0] sm:$0xff]
    %v216 = vld [vmem:[#allocation2 + $0x3c8] sm:$0xf]
    %v217 = vld [vmem:[#allocation2 + $0x3cc] sm:$0xff]
    %v218 = vld [vmem:[#allocation2 + $0x3d4] sm:$0xf]
    %v219 = vld [vmem:[#allocation2 + $0x3d8] sm:$0xff]
    %v220 = vld [vmem:[#allocation2 + $0x3e0] sm:$0xf]
    %v221 = vld [vmem:[#allocation2 + $0x3e4] sm:$0xff]
    %v222 = vld [vmem:[#allocation2 + $0x3ec] sm:$0xf]
    %v223 = vld [vmem:[#allocation2 + $0x3f0] sm:$0xff]
    %v224 = vld [vmem:[#allocation2 + $0x3f8] sm:$0xf]
    %v225 = vld [vmem:[#allocation2 + $0x3fc] sm:$0xff]
    %v226 = vld [vmem:[#allocation2 + $0x404] sm:$0xf]
    %v227 = vld [vmem:[#allocation2 + $0x408] sm:$0xff]
    %v228 = vld [vmem:[#allocation2 + $0x410] sm:$0xf]
    %v229 = vld [vmem:[#allocation2 + $0x414] sm:$0xff]
    %v230 = vld [vmem:[#allocation2 + $0x41c] sm:$0xf]
    %v231 = vld [vmem:[#allocation2 + $0x420] sm:$0xff]
    %v232 = vld [vmem:[#allocation2 + $0x428] sm:$0xf]
    %v233 = vld [vmem:[#allocation2 + $0x42c] sm:$0xff]
    %v234 = vld [vmem:[#allocation2 + $0x434] sm:$0xf]
    %v235 = vld [vmem:[#allocation2 + $0x438] sm:$0xff]
    %v236 = vld [vmem:[#allocation2 + $0x440] sm:$0xf]
    %v237 = vld [vmem:[#allocation2 + $0x444] sm:$0xff]
    %v238 = vld [vmem:[#allocation2 + $0x44c] sm:$0xf]
    %v239 = vld [vmem:[#allocation2 + $0x450] sm:$0xff]
    %v240 = vld [vmem:[#allocation2 + $0x458] sm:$0xf]
    %v241 = vld [vmem:[#allocation2 + $0x45c] sm:$0xff]
    %v242 = vld [vmem:[#allocation2 + $0x464] sm:$0xf]
    %v243 = vld [vmem:[#allocation2 + $0x468] sm:$0xff]
    %v244 = vld [vmem:[#allocation2 + $0x470] sm:$0xf]
    %v245 = vld [vmem:[#allocation2 + $0x474] sm:$0xff]
    %v246 = vld [vmem:[#allocation2 + $0x47c] sm:$0xf]
    %v247 = vld [vmem:[#allocation2 + $0x480] sm:$0xff]
    %v248 = vld [vmem:[#allocation2 + $0x488] sm:$0xf]
    %v249 = vld [vmem:[#allocation2 + $0x48c] sm:$0xff]
    %v250 = vld [vmem:[#allocation2 + $0x494] sm:$0xf]
    %v251 = vld [vmem:[%s2] sm:$0x7]
    %v253 = vlaneseq
    %v254 = vshrl.u32 %v253, 7
    %v255 = vsub.s32 0, %v254
    %v256 = vrot.slane %v251, %v255
    %v257 = vlaneseq
    %v258 = vshrl.u32 %v257, 7
    %v259 = vsub.s32 1, %v258
    %v260 = vrot.slane %v251, %v259
    %v261 = vlaneseq
    %v262 = vshrl.u32 %v261, 7
    %v263 = vsub.s32 2, %v262
    %v264 = vrot.slane %v251, %v263
    %v464 = vunpack.c.l.b16 %v55
    %v465 = vunpack.c.h.b16 %v55
    %v466 = vunpack.c.l.b16 %v56
    %v467 = vunpack.c.l.b16 %v57
    %v468 = vunpack.c.h.b16 %v57
    %v469 = vunpack.c.l.b16 %v58
    %v470 = vunpack.c.l.b16 %v59
    %v471 = vunpack.c.h.b16 %v59
    %v472 = vunpack.c.l.b16 %v60
    %v473 = vunpack.c.l.b16 %v61
    %v474 = vunpack.c.h.b16 %v61
    %v475 = vunpack.c.l.b16 %v62
    %v476 = vunpack.c.l.b16 %v63
    %v477 = vunpack.c.h.b16 %v63
    %v478 = vunpack.c.l.b16 %v64
    %v479 = vunpack.c.l.b16 %v65
    %v480 = vunpack.c.h.b16 %v65
    %v481 = vunpack.c.l.b16 %v66
    %v482 = vunpack.c.l.b16 %v67
    %v483 = vunpack.c.h.b16 %v67
    %v484 = vunpack.c.l.b16 %v68
    %v485 = vunpack.c.l.b16 %v69
    %v486 = vunpack.c.h.b16 %v69
    %v487 = vunpack.c.l.b16 %v70
    %v488 = vunpack.c.l.b16 %v71
    %v489 = vunpack.c.h.b16 %v71
    %v490 = vunpack.c.l.b16 %v72
    %v491 = vunpack.c.l.b16 %v73
    %v492 = vunpack.c.h.b16 %v73
    %v493 = vunpack.c.l.b16 %v74
    %v494 = vunpack.c.l.b16 %v75
    %v495 = vunpack.c.h.b16 %v75
    %v496 = vunpack.c.l.b16 %v76
    %v497 = vunpack.c.l.b16 %v77
    %v498 = vunpack.c.h.b16 %v77
    %v499 = vunpack.c.l.b16 %v78
    %v500 = vunpack.c.l.b16 %v79
    %v501 = vunpack.c.h.b16 %v79
    %v502 = vunpack.c.l.b16 %v80
    %v503 = vunpack.c.l.b16 %v81
    %v504 = vunpack.c.h.b16 %v81
    %v505 = vunpack.c.l.b16 %v82
    %v506 = vunpack.c.l.b16 %v83
    %v507 = vunpack.c.h.b16 %v83
    %v508 = vunpack.c.l.b16 %v84
    %v509 = vunpack.c.l.b16 %v85
    %v510 = vunpack.c.h.b16 %v85
    %v511 = vunpack.c.l.b16 %v86
    %v512 = vunpack.c.l.b16 %v87
    %v513 = vunpack.c.h.b16 %v87
    %v514 = vunpack.c.l.b16 %v88
    %v515 = vunpack.c.l.b16 %v89
    %v516 = vunpack.c.h.b16 %v89
    %v517 = vunpack.c.l.b16 %v90
    %v518 = vunpack.c.l.b16 %v91
    %v519 = vunpack.c.h.b16 %v91
    %v520 = vunpack.c.l.b16 %v92
    %v521 = vunpack.c.l.b16 %v93
    %v522 = vunpack.c.h.b16 %v93
    %v523 = vunpack.c.l.b16 %v94
    %v524 = vunpack.c.l.b16 %v95
    %v525 = vunpack.c.h.b16 %v95
    %v526 = vunpack.c.l.b16 %v96
    %v527 = vunpack.c.l.b16 %v97
    %v528 = vunpack.c.h.b16 %v97
    %v529 = vunpack.c.l.b16 %v98
    %v530 = vunpack.c.l.b16 %v99
    %v531 = vunpack.c.h.b16 %v99
    %v532 = vunpack.c.l.b16 %v100
    %v533 = vunpack.c.l.b16 %v101
    %v534 = vunpack.c.h.b16 %v101
    %v535 = vunpack.c.l.b16 %v102
    %v536 = vunpack.c.l.b16 %v103
    %v537 = vunpack.c.h.b16 %v103
    %v538 = vunpack.c.l.b16 %v104
    %v539 = vunpack.c.l.b16 %v105
    %v540 = vunpack.c.h.b16 %v105
    %v541 = vunpack.c.l.b16 %v106
    %v542 = vunpack.c.l.b16 %v107
    %v543 = vunpack.c.h.b16 %v107
    %v544 = vunpack.c.l.b16 %v108
    %v545 = vunpack.c.l.b16 %v109
    %v546 = vunpack.c.h.b16 %v109
    %v547 = vunpack.c.l.b16 %v110
    %v548 = vunpack.c.l.b16 %v111
    %v549 = vunpack.c.h.b16 %v111
    %v550 = vunpack.c.l.b16 %v112
    %v551 = vunpack.c.l.b16 %v113
    %v552 = vunpack.c.h.b16 %v113
    %v553 = vunpack.c.l.b16 %v114
    %v554 = vunpack.c.l.b16 %v115
    %v555 = vunpack.c.h.b16 %v115
    %v556 = vunpack.c.l.b16 %v116
    %v557 = vunpack.c.l.b16 %v117
    %v558 = vunpack.c.h.b16 %v117
    %v559 = vunpack.c.l.b16 %v118
    %v560 = vunpack.c.l.b16 %v119
    %v561 = vunpack.c.h.b16 %v119
    %v562 = vunpack.c.l.b16 %v120
    %v563 = vunpack.c.l.b16 %v121
    %v564 = vunpack.c.h.b16 %v121
    %v565 = vunpack.c.l.b16 %v122
    %v566 = vunpack.c.l.b16 %v123
    %v567 = vunpack.c.h.b16 %v123
    %v568 = vunpack.c.l.b16 %v124
    %v569 = vunpack.c.l.b16 %v125
    %v570 = vunpack.c.h.b16 %v125
    %v571 = vunpack.c.l.b16 %v126
    %v572 = vunpack.c.l.b16 %v127
    %v573 = vunpack.c.h.b16 %v127
    %v574 = vunpack.c.l.b16 %v128
    %v575 = vunpack.c.l.b16 %v129
    %v576 = vunpack.c.h.b16 %v129
    %v577 = vunpack.c.l.b16 %v130
    %v578 = vunpack.c.l.b16 %v131
    %v579 = vunpack.c.h.b16 %v131
    %v580 = vunpack.c.l.b16 %v132
    %v581 = vunpack.c.l.b16 %v133
    %v582 = vunpack.c.h.b16 %v133
    %v583 = vunpack.c.l.b16 %v134
    %v584 = vunpack.c.l.b16 %v135
    %v585 = vunpack.c.h.b16 %v135
    %v586 = vunpack.c.l.b16 %v136
    %v587 = vunpack.c.l.b16 %v137
    %v588 = vunpack.c.h.b16 %v137
    %v589 = vunpack.c.l.b16 %v138
    %v590 = vunpack.c.l.b16 %v139
    %v591 = vunpack.c.h.b16 %v139
    %v592 = vunpack.c.l.b16 %v140
    %v593 = vunpack.c.l.b16 %v141
    %v594 = vunpack.c.h.b16 %v141
    %v595 = vunpack.c.l.b16 %v142
    %v596 = vunpack.c.l.b16 %v143
    %v597 = vunpack.c.h.b16 %v143
    %v598 = vunpack.c.l.b16 %v144
    %v599 = vunpack.c.l.b16 %v145
    %v600 = vunpack.c.h.b16 %v145
    %v601 = vunpack.c.l.b16 %v146
    %v602 = vunpack.c.l.b16 %v147
    %v603 = vunpack.c.h.b16 %v147
    %v604 = vunpack.c.l.b16 %v148
    %v605 = vunpack.c.l.b16 %v149
    %v606 = vunpack.c.h.b16 %v149
    %v607 = vunpack.c.l.b16 %v150
    %v608 = vunpack.c.l.b16 %v151
    %v609 = vunpack.c.h.b16 %v151
    %v610 = vunpack.c.l.b16 %v152
    %v611 = vunpack.c.l.b16 %v153
    %v612 = vunpack.c.h.b16 %v153
    %v613 = vunpack.c.l.b16 %v154
    %v614 = vunpack.c.l.b16 %v155
    %v615 = vunpack.c.h.b16 %v155
    %v616 = vunpack.c.l.b16 %v156
    %v617 = vunpack.c.l.b16 %v157
    %v618 = vunpack.c.h.b16 %v157
    %v619 = vunpack.c.l.b16 %v158
    %v620 = vunpack.c.l.b16 %v159
    %v621 = vunpack.c.h.b16 %v159
    %v622 = vunpack.c.l.b16 %v160
    %v623 = vunpack.c.l.b16 %v161
    %v624 = vunpack.c.h.b16 %v161
    %v625 = vunpack.c.l.b16 %v162
    %v626 = vunpack.c.l.b16 %v163
    %v627 = vunpack.c.h.b16 %v163
    %v628 = vunpack.c.l.b16 %v164
    %v629 = vunpack.c.l.b16 %v165
    %v630 = vunpack.c.h.b16 %v165
    %v631 = vunpack.c.l.b16 %v166
    %v632 = vunpack.c.l.b16 %v167
    %v633 = vunpack.c.h.b16 %v167
    %v634 = vunpack.c.l.b16 %v168
    %v635 = vunpack.c.l.b16 %v169
    %v636 = vunpack.c.h.b16 %v169
    %v637 = vunpack.c.l.b16 %v170
    %v638 = vunpack.c.l.b16 %v171
    %v639 = vunpack.c.h.b16 %v171
    %v640 = vunpack.c.l.b16 %v172
    %v641 = vunpack.c.l.b16 %v173
    %v642 = vunpack.c.h.b16 %v173
    %v643 = vunpack.c.l.b16 %v174
    %v644 = vunpack.c.l.b16 %v175
    %v645 = vunpack.c.h.b16 %v175
    %v646 = vunpack.c.l.b16 %v176
    %v647 = vunpack.c.l.b16 %v177
    %v648 = vunpack.c.h.b16 %v177
    %v649 = vunpack.c.l.b16 %v178
    %v650 = vunpack.c.l.b16 %v179
    %v651 = vunpack.c.h.b16 %v179
    %v652 = vunpack.c.l.b16 %v180
    %v653 = vunpack.c.l.b16 %v181
    %v654 = vunpack.c.h.b16 %v181
    %v655 = vunpack.c.l.b16 %v182
    %v656 = vunpack.c.l.b16 %v183
    %v657 = vunpack.c.h.b16 %v183
    %v658 = vunpack.c.l.b16 %v184
    %v659 = vunpack.c.l.b16 %v185
    %v660 = vunpack.c.h.b16 %v185
    %v661 = vunpack.c.l.b16 %v186
    %v662 = vunpack.c.l.b16 %v187
    %v663 = vunpack.c.h.b16 %v187
    %v664 = vunpack.c.l.b16 %v188
    %v665 = vunpack.c.l.b16 %v189
    %v666 = vunpack.c.h.b16 %v189
    %v667 = vunpack.c.l.b16 %v190
    %v668 = vunpack.c.l.b16 %v191
    %v669 = vunpack.c.h.b16 %v191
    %v670 = vunpack.c.l.b16 %v192
    %v671 = vunpack.c.l.b16 %v193
    %v672 = vunpack.c.h.b16 %v193
    %v673 = vunpack.c.l.b16 %v194
    %v674 = vunpack.c.l.b16 %v195
    %v675 = vunpack.c.h.b16 %v195
    %v676 = vunpack.c.l.b16 %v196
    %v677 = vunpack.c.l.b16 %v197
    %v678 = vunpack.c.h.b16 %v197
    %v679 = vunpack.c.l.b16 %v198
    %v680 = vunpack.c.l.b16 %v199
    %v681 = vunpack.c.h.b16 %v199
    %v682 = vunpack.c.l.b16 %v200
    %v683 = vunpack.c.l.b16 %v201
    %v684 = vunpack.c.h.b16 %v201
    %v685 = vunpack.c.l.b16 %v202
    %v686 = vunpack.c.l.b16 %v203
    %v687 = vunpack.c.h.b16 %v203
    %v688 = vunpack.c.l.b16 %v204
    %v689 = vunpack.c.l.b16 %v205
    %v690 = vunpack.c.h.b16 %v205
    %v691 = vunpack.c.l.b16 %v206
    %v692 = vunpack.c.l.b16 %v207
    %v693 = vunpack.c.h.b16 %v207
    %v694 = vunpack.c.l.b16 %v208
    %v695 = vunpack.c.l.b16 %v209
    %v696 = vunpack.c.h.b16 %v209
    %v697 = vunpack.c.l.b16 %v210
    %v698 = vunpack.c.l.b16 %v211
    %v699 = vunpack.c.h.b16 %v211
    %v700 = vunpack.c.l.b16 %v212
    %v701 = vunpack.c.l.b16 %v213
    %v702 = vunpack.c.h.b16 %v213
    %v703 = vunpack.c.l.b16 %v214
    %v704 = vunpack.c.l.b16 %v215
    %v705 = vunpack.c.h.b16 %v215
    %v706 = vunpack.c.l.b16 %v216
    %v707 = vunpack.c.l.b16 %v217
    %v708 = vunpack.c.h.b16 %v217
    %v709 = vunpack.c.l.b16 %v218
    %v710 = vunpack.c.l.b16 %v219
    %v711 = vunpack.c.h.b16 %v219
    %v712 = vunpack.c.l.b16 %v220
    %v713 = vunpack.c.l.b16 %v221
    %v714 = vunpack.c.h.b16 %v221
    %v715 = vunpack.c.l.b16 %v222
    %v716 = vunpack.c.l.b16 %v223
    %v717 = vunpack.c.h.b16 %v223
    %v718 = vunpack.c.l.b16 %v224
    %v719 = vunpack.c.l.b16 %v225
    %v720 = vunpack.c.h.b16 %v225
    %v721 = vunpack.c.l.b16 %v226
    %v722 = vunpack.c.l.b16 %v227
    %v723 = vunpack.c.h.b16 %v227
    %v724 = vunpack.c.l.b16 %v228
    %v725 = vunpack.c.l.b16 %v229
    %v726 = vunpack.c.h.b16 %v229
    %v727 = vunpack.c.l.b16 %v230
    %v728 = vunpack.c.l.b16 %v231
    %v729 = vunpack.c.h.b16 %v231
    %v730 = vunpack.c.l.b16 %v232
    %v731 = vunpack.c.l.b16 %v233
    %v732 = vunpack.c.h.b16 %v233
    %v733 = vunpack.c.l.b16 %v234
    %v734 = vunpack.c.l.b16 %v235
    %v735 = vunpack.c.h.b16 %v235
    %v736 = vunpack.c.l.b16 %v236
    %v737 = vunpack.c.l.b16 %v237
    %v738 = vunpack.c.h.b16 %v237
    %v739 = vunpack.c.l.b16 %v238
    %v740 = vunpack.c.l.b16 %v239
    %v741 = vunpack.c.h.b16 %v239
    %v742 = vunpack.c.l.b16 %v240
    %v743 = vunpack.c.l.b16 %v241
    %v744 = vunpack.c.h.b16 %v241
    %v745 = vunpack.c.l.b16 %v242
    %v746 = vunpack.c.l.b16 %v243
    %v747 = vunpack.c.h.b16 %v243
    %v748 = vunpack.c.l.b16 %v244
    %v749 = vunpack.c.l.b16 %v245
    %v750 = vunpack.c.h.b16 %v245
    %v751 = vunpack.c.l.b16 %v246
    %v752 = vunpack.c.l.b16 %v247
    %v753 = vunpack.c.h.b16 %v247
    %v754 = vunpack.c.l.b16 %v248
    %v755 = vunpack.c.l.b16 %v249
    %v756 = vunpack.c.h.b16 %v249
    %v757 = vunpack.c.l.b16 %v250
    %v758 = vpack.c.b16 %v467, %v464
    %v759 = vpack.c.b16 %v468, %v465
    %v760 = vpack.c.b16 %v469, %v466
    %v761 = vpack.c.b16 %v473, %v470
    %v762 = vpack.c.b16 %v474, %v471
    %v763 = vpack.c.b16 %v475, %v472
    %v764 = vpack.c.b16 %v479, %v476
    %v765 = vpack.c.b16 %v480, %v477
    %v766 = vpack.c.b16 %v481, %v478
    %v767 = vpack.c.b16 %v485, %v482
    %v768 = vpack.c.b16 %v486, %v483
    %v769 = vpack.c.b16 %v487, %v484
    %v770 = vpack.c.b16 %v491, %v488
    %v771 = vpack.c.b16 %v492, %v489
    %v772 = vpack.c.b16 %v493, %v490
    %v773 = vpack.c.b16 %v497, %v494
    %v774 = vpack.c.b16 %v498, %v495
    %v775 = vpack.c.b16 %v499, %v496
    %v776 = vpack.c.b16 %v503, %v500
    %v777 = vpack.c.b16 %v504, %v501
    %v778 = vpack.c.b16 %v505, %v502
    %v779 = vpack.c.b16 %v509, %v506
    %v780 = vpack.c.b16 %v510, %v507
    %v781 = vpack.c.b16 %v511, %v508
    %v782 = vpack.c.b16 %v515, %v512
    %v783 = vpack.c.b16 %v516, %v513
    %v784 = vpack.c.b16 %v517, %v514
    %v785 = vpack.c.b16 %v521, %v518
    %v786 = vpack.c.b16 %v522, %v519
    %v787 = vpack.c.b16 %v523, %v520
    %v788 = vpack.c.b16 %v527, %v524
    %v789 = vpack.c.b16 %v528, %v525
    %v790 = vpack.c.b16 %v529, %v526
    %v791 = vpack.c.b16 %v533, %v530
    %v792 = vpack.c.b16 %v534, %v531
    %v793 = vpack.c.b16 %v535, %v532
    %v794 = vpack.c.b16 %v539, %v536
    %v795 = vpack.c.b16 %v540, %v537
    %v796 = vpack.c.b16 %v541, %v538
    %v797 = vpack.c.b16 %v545, %v542
    %v798 = vpack.c.b16 %v546, %v543
    %v799 = vpack.c.b16 %v547, %v544
    %v800 = vpack.c.b16 %v551, %v548
    %v801 = vpack.c.b16 %v552, %v549
    %v802 = vpack.c.b16 %v553, %v550
    %v803 = vpack.c.b16 %v557, %v554
    %v804 = vpack.c.b16 %v558, %v555
    %v805 = vpack.c.b16 %v559, %v556
    %v806 = vpack.c.b16 %v563, %v560
    %v807 = vpack.c.b16 %v564, %v561
    %v808 = vpack.c.b16 %v565, %v562
    %v809 = vpack.c.b16 %v569, %v566
    %v810 = vpack.c.b16 %v570, %v567
    %v811 = vpack.c.b16 %v571, %v568
    %v812 = vpack.c.b16 %v575, %v572
    %v813 = vpack.c.b16 %v576, %v573
    %v814 = vpack.c.b16 %v577, %v574
    %v815 = vpack.c.b16 %v581, %v578
    %v816 = vpack.c.b16 %v582, %v579
    %v817 = vpack.c.b16 %v583, %v580
    %v818 = vpack.c.b16 %v587, %v584
    %v819 = vpack.c.b16 %v588, %v585
    %v820 = vpack.c.b16 %v589, %v586
    %v821 = vpack.c.b16 %v593, %v590
    %v822 = vpack.c.b16 %v594, %v591
    %v823 = vpack.c.b16 %v595, %v592
    %v824 = vpack.c.b16 %v599, %v596
    %v825 = vpack.c.b16 %v600, %v597
    %v826 = vpack.c.b16 %v601, %v598
    %v827 = vpack.c.b16 %v605, %v602
    %v828 = vpack.c.b16 %v606, %v603
    %v829 = vpack.c.b16 %v607, %v604
    %v830 = vpack.c.b16 %v611, %v608
    %v831 = vpack.c.b16 %v612, %v609
    %v832 = vpack.c.b16 %v613, %v610
    %v833 = vpack.c.b16 %v617, %v614
    %v834 = vpack.c.b16 %v618, %v615
    %v835 = vpack.c.b16 %v619, %v616
    %v836 = vpack.c.b16 %v623, %v620
    %v837 = vpack.c.b16 %v624, %v621
    %v838 = vpack.c.b16 %v625, %v622
    %v839 = vpack.c.b16 %v629, %v626
    %v840 = vpack.c.b16 %v630, %v627
    %v841 = vpack.c.b16 %v631, %v628
    %v842 = vpack.c.b16 %v635, %v632
    %v843 = vpack.c.b16 %v636, %v633
    %v844 = vpack.c.b16 %v637, %v634
    %v845 = vpack.c.b16 %v641, %v638
    %v846 = vpack.c.b16 %v642, %v639
    %v847 = vpack.c.b16 %v643, %v640
    %v848 = vpack.c.b16 %v647, %v644
    %v849 = vpack.c.b16 %v648, %v645
    %v850 = vpack.c.b16 %v649, %v646
    %v851 = vpack.c.b16 %v653, %v650
    %v852 = vpack.c.b16 %v654, %v651
    %v853 = vpack.c.b16 %v655, %v652
    %v854 = vpack.c.b16 %v659, %v656
    %v855 = vpack.c.b16 %v660, %v657
    %v856 = vpack.c.b16 %v661, %v658
    %v857 = vpack.c.b16 %v665, %v662
    %v858 = vpack.c.b16 %v666, %v663
    %v859 = vpack.c.b16 %v667, %v664
    %v860 = vpack.c.b16 %v671, %v668
    %v861 = vpack.c.b16 %v672, %v669
    %v862 = vpack.c.b16 %v673, %v670
    %v863 = vpack.c.b16 %v677, %v674
    %v864 = vpack.c.b16 %v678, %v675
    %v865 = vpack.c.b16 %v679, %v676
    %v866 = vpack.c.b16 %v683, %v680
    %v867 = vpack.c.b16 %v684, %v681
    %v868 = vpack.c.b16 %v685, %v682
    %v869 = vpack.c.b16 %v689, %v686
    %v870 = vpack.c.b16 %v690, %v687
    %v871 = vpack.c.b16 %v691, %v688
    %v872 = vpack.c.b16 %v695, %v692
    %v873 = vpack.c.b16 %v696, %v693
    %v874 = vpack.c.b16 %v697, %v694
    %v875 = vpack.c.b16 %v701, %v698
    %v876 = vpack.c.b16 %v702, %v699
    %v877 = vpack.c.b16 %v703, %v700
    %v878 = vpack.c.b16 %v707, %v704
    %v879 = vpack.c.b16 %v708, %v705
    %v880 = vpack.c.b16 %v709, %v706
    %v881 = vpack.c.b16 %v713, %v710
    %v882 = vpack.c.b16 %v714, %v711
    %v883 = vpack.c.b16 %v715, %v712
    %v884 = vpack.c.b16 %v719, %v716
    %v885 = vpack.c.b16 %v720, %v717
    %v886 = vpack.c.b16 %v721, %v718
    %v887 = vpack.c.b16 %v725, %v722
    %v888 = vpack.c.b16 %v726, %v723
    %v889 = vpack.c.b16 %v727, %v724
    %v890 = vpack.c.b16 %v731, %v728
    %v891 = vpack.c.b16 %v732, %v729
    %v892 = vpack.c.b16 %v733, %v730
    %v893 = vpack.c.b16 %v737, %v734
    %v894 = vpack.c.b16 %v738, %v735
    %v895 = vpack.c.b16 %v739, %v736
    %v896 = vpack.c.b16 %v743, %v740
    %v897 = vpack.c.b16 %v744, %v741
    %v898 = vpack.c.b16 %v745, %v742
    %v899 = vpack.c.b16 %v749, %v746
    %v900 = vpack.c.b16 %v750, %v747
    %v901 = vpack.c.b16 %v751, %v748
    %v902 = vpack.c.b16 %v755, %v752
    %v903 = vpack.c.b16 %v756, %v753
    %v904 = vpack.c.b16 %v757, %v754
    %vm1052 = vcmask 130048
    %v1054 = vsel %vm1052, %v54, 0
    %1056 = vmatprep.subr.bf16.mxu0 %v759
    %1057 = vmatpush1.bf16.msra.mxu0 %v758
    %1058 = vmatprep.subr.bf16.mxu0 %v762
    %1059 = vmatpush1.bf16.msra.mxu0 %v761
    %1060 = vmatprep.subr.bf16.mxu0 %v765
    %1061 = vmatpush1.bf16.msra.mxu0 %v764
    %1062 = vmatprep.subr.bf16.mxu0 %v768
    %1063 = vmatpush1.bf16.msra.mxu0 %v767
    %1064 = vmatprep.subr.bf16.mxu0 %v771
    %1065 = vmatpush1.bf16.msra.mxu0 %v770
    %1066 = vmatprep.subr.bf16.mxu0 %v774
    %1067 = vmatpush1.bf16.msra.mxu0 %v773
    %1068 = vmatprep.subr.bf16.mxu0 %v777
    %1069 = vmatpush1.bf16.msra.mxu0 %v776
    %1070 = vmatprep.subr.bf16.mxu0 %v780
    %1071 = vmatpush1.bf16.msra.mxu0 %v779
    %1072 = vmatprep.subr.bf16.mxu0 %v783
    %1073 = vmatpush1.bf16.msra.mxu0 %v782
    %1074 = vmatprep.subr.bf16.mxu0 %v786
    %1075 = vmatpush1.bf16.msra.mxu0 %v785
    %1076 = vmatprep.subr.bf16.mxu0 %v789
    %1077 = vmatpush1.bf16.msra.mxu0 %v788
    %1078 = vmatprep.subr.bf16.mxu0 %v792
    %1079 = vmatpush1.bf16.msra.mxu0 %v791
    %1080 = vmatprep.subr.bf16.mxu0 %v795
    %1081 = vmatpush1.bf16.msra.mxu0 %v794
    %1082 = vmatprep.subr.bf16.mxu0 %v798
    %1083 = vmatpush1.bf16.msra.mxu0 %v797
    %1084 = vmatprep.subr.bf16.mxu0 %v801
    %1085 = vmatpush1.bf16.msra.mxu0 %v800
    %1086 = vmatprep.subr.bf16.mxu0 %v804
    %1087 = vmatpush1.bf16.msra.mxu0 %v803
    %1088 = vmatprep.mubr.bf16.mxu0 %v49
    %1089 = vmatmul.mubr.bf16.gmra.mrb[0].mxu0 %v48
    %v1090 = vpop.f32.mrb[0].mxu0
    %v1091 = vadd.f32 %v256, %v1090
    %v1092 = vpop.f32.mrb[0].mxu0
    %v1093 = vadd.f32 %v260, %v1092
    %v1094 = vpop.f32.mrb[0].mxu0
    %v1095 = vpop.f32.mrb[0].mxu0
    %1096 = vdwg.mxu0
    %1097 = vmatprep.subr.bf16.mxu0 %v807
    %1098 = vmatpush1.bf16.msra.mxu0 %v806
    %1099 = vmatprep.subr.bf16.mxu0 %v810
    %1100 = vmatpush1.bf16.msra.mxu0 %v809
    %1101 = vmatprep.subr.bf16.mxu0 %v813
    %1102 = vmatpush1.bf16.msra.mxu0 %v812
    %1103 = vmatprep.subr.bf16.mxu0 %v816
    %1104 = vmatpush1.bf16.msra.mxu0 %v815
    %1105 = vmatprep.subr.bf16.mxu0 %v819
    %1106 = vmatpush1.bf16.msra.mxu0 %v818
    %1107 = vmatprep.subr.bf16.mxu0 %v822
    %1108 = vmatpush1.bf16.msra.mxu0 %v821
    %1109 = vmatprep.subr.bf16.mxu0 %v825
    %1110 = vmatpush1.bf16.msra.mxu0 %v824
    %1111 = vmatprep.subr.bf16.mxu0 %v828
    %1112 = vmatpush1.bf16.msra.mxu0 %v827
    %1113 = vmatprep.subr.bf16.mxu0 %v831
    %1114 = vmatpush1.bf16.msra.mxu0 %v830
    %1115 = vmatprep.subr.bf16.mxu0 %v834
    %1116 = vmatpush1.bf16.msra.mxu0 %v833
    %1117 = vmatprep.subr.bf16.mxu0 %v837
    %1118 = vmatpush1.bf16.msra.mxu0 %v836
    %1119 = vmatprep.subr.bf16.mxu0 %v840
    %1120 = vmatpush1.bf16.msra.mxu0 %v839
    %1121 = vmatprep.subr.bf16.mxu0 %v843
    %1122 = vmatpush1.bf16.msra.mxu0 %v842
    %1123 = vmatprep.subr.bf16.mxu0 %v846
    %1124 = vmatpush1.bf16.msra.mxu0 %v845
    %1125 = vmatprep.subr.bf16.mxu0 %v849
    %1126 = vmatpush1.bf16.msra.mxu0 %v848
    %1127 = vmatprep.subr.bf16.mxu0 %v852
    %1128 = vmatpush1.bf16.msra.mxu0 %v851
    %1129 = vmatprep.mubr.bf16.mxu0 %v51
    %1130 = vmatmul.mubr.bf16.gmra.mrb[0].mxu0 %v50
    %v1131 = vpop.f32.mrb[0].mxu0
    %v1132 = vadd.f32 %v1091, %v1131
    %v1133 = vpop.f32.mrb[0].mxu0
    %v1134 = vadd.f32 %v1093, %v1133
    %v1135 = vpop.f32.mrb[0].mxu0
    %v1136 = vpop.f32.mrb[0].mxu0
    %1137 = vdwg.mxu0
    %1138 = vmatprep.subr.bf16.mxu0 %v855
    %1139 = vmatpush1.bf16.msra.mxu0 %v854
    %1140 = vmatprep.subr.bf16.mxu0 %v858
    %1141 = vmatpush1.bf16.msra.mxu0 %v857
    %1142 = vmatprep.subr.bf16.mxu0 %v861
    %1143 = vmatpush1.bf16.msra.mxu0 %v860
    %1144 = vmatprep.subr.bf16.mxu0 %v864
    %1145 = vmatpush1.bf16.msra.mxu0 %v863
    %1146 = vmatprep.subr.bf16.mxu0 %v867
    %1147 = vmatpush1.bf16.msra.mxu0 %v866
    %1148 = vmatprep.subr.bf16.mxu0 %v870
    %1149 = vmatpush1.bf16.msra.mxu0 %v869
    %1150 = vmatprep.subr.bf16.mxu0 %v873
    %1151 = vmatpush1.bf16.msra.mxu0 %v872
    %1152 = vmatprep.subr.bf16.mxu0 %v876
    %1153 = vmatpush1.bf16.msra.mxu0 %v875
    %1154 = vmatprep.subr.bf16.mxu0 %v879
    %1155 = vmatpush1.bf16.msra.mxu0 %v878
    %1156 = vmatprep.subr.bf16.mxu0 %v882
    %1157 = vmatpush1.bf16.msra.mxu0 %v881
    %1158 = vmatprep.subr.bf16.mxu0 %v885
    %1159 = vmatpush1.bf16.msra.mxu0 %v884
    %1160 = vmatprep.subr.bf16.mxu0 %v888
    %1161 = vmatpush1.bf16.msra.mxu0 %v887
    %1162 = vmatprep.subr.bf16.mxu0 %v891
    %1163 = vmatpush1.bf16.msra.mxu0 %v890
    %1164 = vmatprep.subr.bf16.mxu0 %v894
    %1165 = vmatpush1.bf16.msra.mxu0 %v893
    %1166 = vmatprep.subr.bf16.mxu0 %v897
    %1167 = vmatpush1.bf16.msra.mxu0 %v896
    %1168 = vmatprep.subr.bf16.mxu0 %v900
    %1169 = vmatpush1.bf16.msra.mxu0 %v899
    %1170 = vmatprep.mubr.bf16.mxu0 %v53
    %1171 = vmatmul.mubr.bf16.gmra.mrb[0].mxu0 %v52
    %v1172 = vpop.f32.mrb[0].mxu0
    %v1173 = vadd.f32 %v1132, %v1172
    %v1174 = vpop.f32.mrb[0].mxu0
    %v1175 = vadd.f32 %v1134, %v1174
    %v1176 = vpop.f32.mrb[0].mxu0
    %v1177 = vpop.f32.mrb[0].mxu0
    %1178 = vdwg.mxu0
    %1179 = vmatprep.subr.bf16.mxu0 %v903
    %1180 = vmatpush1.bf16.msra.mxu0 %v902
    %1181 = vmatprep.subr.bf16.mxu0 0
    %1182 = vmatpush1.bf16.msra.mxu0 0
    %1183 = vmatprep.subr.bf16.mxu0 0
    %1184 = vmatpush1.bf16.msra.mxu0 0
    %1185 = vmatprep.subr.bf16.mxu0 0
    %1186 = vmatpush1.bf16.msra.mxu0 0
    %1187 = vmatprep.subr.bf16.mxu0 0
    %1188 = vmatpush1.bf16.msra.mxu0 0
    %1189 = vmatprep.subr.bf16.mxu0 0
    %1190 = vmatpush1.bf16.msra.mxu0 0
    %1191 = vmatprep.subr.bf16.mxu0 0
    %1192 = vmatpush1.bf16.msra.mxu0 0
    %1193 = vmatprep.subr.bf16.mxu0 0
    %1194 = vmatpush1.bf16.msra.mxu0 0
    %1195 = vmatprep.subr.bf16.mxu0 0
    %1196 = vmatpush1.bf16.msra.mxu0 0
    %1197 = vmatprep.subr.bf16.mxu0 0
    %1198 = vmatpush1.bf16.msra.mxu0 0
    %1199 = vmatprep.subr.bf16.mxu0 0
    %1200 = vmatpush1.bf16.msra.mxu0 0
    %1201 = vmatprep.subr.bf16.mxu0 0
    %1202 = vmatpush1.bf16.msra.mxu0 0
    %1203 = vmatprep.subr.bf16.mxu0 0
    %1204 = vmatpush1.bf16.msra.mxu0 0
    %1205 = vmatprep.subr.bf16.mxu0 0
    %1206 = vmatpush1.bf16.msra.mxu0 0
    %1207 = vmatprep.subr.bf16.mxu0 0
    %1208 = vmatpush1.bf16.msra.mxu0 0
    %1209 = vmatprep.subr.bf16.mxu0 0
    %1210 = vmatpush1.bf16.msra.mxu0 0
    %1211 = vmatprep.mubr.bf16.mxu0 0
    %1212 = vmatmul.mubr.bf16.gmra.mrb[0].mxu0 %v1054
    %v1213 = vpop.f32.mrb[0].mxu0
    %v1214 = vadd.f32 %v1173, %v1213
    %v1215 = vpop.f32.mrb[0].mxu0
    %v1216 = vadd.f32 %v1175, %v1215
    %v1217 = vpop.f32.mrb[0].mxu0
    %v1218 = vpop.f32.mrb[0].mxu0
    %1219 = vdwg.mxu0
    %1220 = vmatprep.subr.bf16.mxu0 0
    %1221 = vmatpush1.bf16.msra.mxu0 %v760
    %1222 = vmatprep.subr.bf16.mxu0 0
    %1223 = vmatpush1.bf16.msra.mxu0 %v763
    %1224 = vmatprep.subr.bf16.mxu0 0
    %1225 = vmatpush1.bf16.msra.mxu0 %v766
    %1226 = vmatprep.subr.bf16.mxu0 0
    %1227 = vmatpush1.bf16.msra.mxu0 %v769
    %1228 = vmatprep.subr.bf16.mxu0 0
    %1229 = vmatpush1.bf16.msra.mxu0 %v772
    %1230 = vmatprep.subr.bf16.mxu0 0
    %1231 = vmatpush1.bf16.msra.mxu0 %v775
    %1232 = vmatprep.subr.bf16.mxu0 0
    %1233 = vmatpush1.bf16.msra.mxu0 %v778
    %1234 = vmatprep.subr.bf16.mxu0 0
    %1235 = vmatpush1.bf16.msra.mxu0 %v781
    %1236 = vmatprep.subr.bf16.mxu0 0
    %1237 = vmatpush1.bf16.msra.mxu0 %v784
    %1238 = vmatprep.subr.bf16.mxu0 0
    %1239 = vmatpush1.bf16.msra.mxu0 %v787
    %1240 = vmatprep.subr.bf16.mxu0 0
    %1241 = vmatpush1.bf16.msra.mxu0 %v790
    %1242 = vmatprep.subr.bf16.mxu0 0
    %1243 = vmatpush1.bf16.msra.mxu0 %v793
    %1244 = vmatprep.subr.bf16.mxu0 0
    %1245 = vmatpush1.bf16.msra.mxu0 %v796
    %1246 = vmatprep.subr.bf16.mxu0 0
    %1247 = vmatpush1.bf16.msra.mxu0 %v799
    %1248 = vmatprep.subr.bf16.mxu0 0
    %1249 = vmatpush1.bf16.msra.mxu0 %v802
    %1250 = vmatprep.subr.bf16.mxu0 0
    %1251 = vmatpush1.bf16.msra.mxu0 %v805
    %1252 = vmatprep.mubr.bf16.mxu0 %v49
    %1253 = vmatmul.mubr.bf16.gmra.mrb[0].mxu0 %v48
    %v1254 = vpop.f32.mrb[0].mxu0
    %v1255 = vadd.f32 %v264, %v1254
    %v1256 = vpop.f32.mrb[0].mxu0
    %v1257 = vpop.f32.mrb[0].mxu0
    %v1258 = vpop.f32.mrb[0].mxu0
    %1259 = vdwg.mxu0
    %1260 = vmatprep.subr.bf16.mxu0 0
    %1261 = vmatpush1.bf16.msra.mxu0 %v808
    %1262 = vmatprep.subr.bf16.mxu0 0
    %1263 = vmatpush1.bf16.msra.mxu0 %v811
    %1264 = vmatprep.subr.bf16.mxu0 0
    %1265 = vmatpush1.bf16.msra.mxu0 %v814
    %1266 = vmatprep.subr.bf16.mxu0 0
    %1267 = vmatpush1.bf16.msra.mxu0 %v817
    %1268 = vmatprep.subr.bf16.mxu0 0
    %1269 = vmatpush1.bf16.msra.mxu0 %v820
    %1270 = vmatprep.subr.bf16.mxu0 0
    %1271 = vmatpush1.bf16.msra.mxu0 %v823
    %1272 = vmatprep.subr.bf16.mxu0 0
    %1273 = vmatpush1.bf16.msra.mxu0 %v826
    %1274 = vmatprep.subr.bf16.mxu0 0
    %1275 = vmatpush1.bf16.msra.mxu0 %v829
    %1276 = vmatprep.subr.bf16.mxu0 0
    %1277 = vmatpush1.bf16.msra.mxu0 %v832
    %1278 = vmatprep.subr.bf16.mxu0 0
    %1279 = vmatpush1.bf16.msra.mxu0 %v835
    %1280 = vmatprep.subr.bf16.mxu0 0
    %1281 = vmatpush1.bf16.msra.mxu0 %v838
    %1282 = vmatprep.subr.bf16.mxu0 0
    %1283 = vmatpush1.bf16.msra.mxu0 %v841
    %1284 = vmatprep.subr.bf16.mxu0 0
    %1285 = vmatpush1.bf16.msra.mxu0 %v844
    %1286 = vmatprep.subr.bf16.mxu0 0
    %1287 = vmatpush1.bf16.msra.mxu0 %v847
    %1288 = vmatprep.subr.bf16.mxu0 0
    %1289 = vmatpush1.bf16.msra.mxu0 %v850
    %1290 = vmatprep.subr.bf16.mxu0 0
    %1291 = vmatpush1.bf16.msra.mxu0 %v853
    %1292 = vmatprep.mubr.bf16.mxu0 %v51
    %1293 = vmatmul.mubr.bf16.gmra.mrb[0].mxu0 %v50
    %v1294 = vpop.f32.mrb[0].mxu0
    %v1295 = vadd.f32 %v1255, %v1294
    %v1296 = vpop.f32.mrb[0].mxu0
    %v1297 = vpop.f32.mrb[0].mxu0
    %v1298 = vpop.f32.mrb[0].mxu0
    %1299 = vdwg.mxu0
    %1300 = vmatprep.subr.bf16.mxu0 0
    %1301 = vmatpush1.bf16.msra.mxu0 %v856
    %1302 = vmatprep.subr.bf16.mxu0 0
    %1303 = vmatpush1.bf16.msra.mxu0 %v859
    %1304 = vmatprep.subr.bf16.mxu0 0
    %1305 = vmatpush1.bf16.msra.mxu0 %v862
    %1306 = vmatprep.subr.bf16.mxu0 0
    %1307 = vmatpush1.bf16.msra.mxu0 %v865
    %1308 = vmatprep.subr.bf16.mxu0 0
    %1309 = vmatpush1.bf16.msra.mxu0 %v868
    %1310 = vmatprep.subr.bf16.mxu0 0
    %1311 = vmatpush1.bf16.msra.mxu0 %v871
    %1312 = vmatprep.subr.bf16.mxu0 0
    %1313 = vmatpush1.bf16.msra.mxu0 %v874
    %1314 = vmatprep.subr.bf16.mxu0 0
    %1315 = vmatpush1.bf16.msra.mxu0 %v877
    %1316 = vmatprep.subr.bf16.mxu0 0
    %1317 = vmatpush1.bf16.msra.mxu0 %v880
    %1318 = vmatprep.subr.bf16.mxu0 0
    %1319 = vmatpush1.bf16.msra.mxu0 %v883
    %1320 = vmatprep.subr.bf16.mxu0 0
    %1321 = vmatpush1.bf16.msra.mxu0 %v886
    %1322 = vmatprep.subr.bf16.mxu0 0
    %1323 = vmatpush1.bf16.msra.mxu0 %v889
    %1324 = vmatprep.subr.bf16.mxu0 0
    %1325 = vmatpush1.bf16.msra.mxu0 %v892
    %1326 = vmatprep.subr.bf16.mxu0 0
    %1327 = vmatpush1.bf16.msra.mxu0 %v895
    %1328 = vmatprep.subr.bf16.mxu0 0
    %1329 = vmatpush1.bf16.msra.mxu0 %v898
    %1330 = vmatprep.subr.bf16.mxu0 0
    %1331 = vmatpush1.bf16.msra.mxu0 %v901
    %1332 = vmatprep.mubr.bf16.mxu0 %v53
    %1333 = vmatmul.mubr.bf16.gmra.mrb[0].mxu0 %v52
    %v1334 = vpop.f32.mrb[0].mxu0
    %v1335 = vadd.f32 %v1295, %v1334
    %v1336 = vpop.f32.mrb[0].mxu0
    %v1337 = vpop.f32.mrb[0].mxu0
    %v1338 = vpop.f32.mrb[0].mxu0
    %1339 = vdwg.mxu0
    %1340 = vmatprep.subr.bf16.mxu0 0
    %1341 = vmatpush1.bf16.msra.mxu0 %v904
    %1342 = vmatprep.subr.bf16.mxu0 0
    %1343 = vmatpush1.bf16.msra.mxu0 0
    %1344 = vmatprep.subr.bf16.mxu0 0
    %1345 = vmatpush1.bf16.msra.mxu0 0
    %1346 = vmatprep.subr.bf16.mxu0 0
    %1347 = vmatpush1.bf16.msra.mxu0 0
    %1348 = vmatprep.subr.bf16.mxu0 0
    %1349 = vmatpush1.bf16.msra.mxu0 0
    %1350 = vmatprep.subr.bf16.mxu0 0
    %1351 = vmatpush1.bf16.msra.mxu0 0
    %1352 = vmatprep.subr.bf16.mxu0 0
    %1353 = vmatpush1.bf16.msra.mxu0 0
    %1354 = vmatprep.subr.bf16.mxu0 0
    %1355 = vmatpush1.bf16.msra.mxu0 0
    %1356 = vmatprep.subr.bf16.mxu0 0
    %1357 = vmatpush1.bf16.msra.mxu0 0
    %1358 = vmatprep.subr.bf16.mxu0 0
    %1359 = vmatpush1.bf16.msra.mxu0 0
    %1360 = vmatprep.subr.bf16.mxu0 0
    %1361 = vmatpush1.bf16.msra.mxu0 0
    %1362 = vmatprep.subr.bf16.mxu0 0
    %1363 = vmatpush1.bf16.msra.mxu0 0
    %1364 = vmatprep.subr.bf16.mxu0 0
    %1365 = vmatpush1.bf16.msra.mxu0 0
    %1366 = vmatprep.subr.bf16.mxu0 0
    %1367 = vmatpush1.bf16.msra.mxu0 0
    %1368 = vmatprep.subr.bf16.mxu0 0
    %1369 = vmatpush1.bf16.msra.mxu0 0
    %1370 = vmatprep.subr.bf16.mxu0 0
    %1371 = vmatpush1.bf16.msra.mxu0 0
    %1372 = vmatprep.mubr.bf16.mxu0 0
    %1373 = vmatmul.mubr.bf16.gmra.mrb[0].mxu0 %v1054
    %v1374 = vpop.f32.mrb[0].mxu0
    %v1375 = vadd.f32 %v1335, %v1374
    %v1376 = vpop.f32.mrb[0].mxu0
    %v1377 = vpop.f32.mrb[0].mxu0
    %v1378 = vpop.f32.mrb[0].mxu0
    %1379 = vdwg.mxu0
    %v1380 = vmax.f32 %v1214, 0.0
    %v1381 = vmax.f32 %v1216, 0.0
    %v1382 = vmax.f32 %v1375, 0.0
    %v1383 = vpack.c.bf16 %v1380, %v1380
    %v1384 = vpack.c.bf16 %v1381, %v1381
    %v1385 = vpack.c.bf16 %v1382, %v1382
    %v1386 = vld [vmem:[%s3] sm:$0xff]
    %v1387 = vld [vmem:[%s3 + $0x8] sm:$0xff]
    %v1388 = vld [vmem:[%s3 + $0x10] sm:$0xff]
    %v1389 = vld [vmem:[%s3 + $0x18] sm:$0xff]
    %v1390 = vld [vmem:[%s3 + $0x20] sm:$0xff]
    %v1391 = vld [vmem:[%s3 + $0x28] sm:$0xff]
    %v1392 = vld [vmem:[%s3 + $0x30] sm:$0xff]
    %v1393 = vld [vmem:[%s3 + $0x38] sm:$0xff]
    %v1394 = vld [vmem:[%s3 + $0x40] sm:$0xff]
    %v1395 = vld [vmem:[%s3 + $0x48] sm:$0xff]
    %v1396 = vld [vmem:[%s3 + $0x50] sm:$0xff]
    %v1397 = vld [vmem:[%s3 + $0x58] sm:$0xff]
    %v1398 = vld [vmem:[%s3 + $0x60] sm:$0xff]
    %v1399 = vld [vmem:[%s3 + $0x68] sm:$0xff]
    %v1400 = vld [vmem:[%s3 + $0x70] sm:$0xff]
    %v1401 = vld [vmem:[%s3 + $0x78] sm:$0xff]
    %v1402 = vld [vmem:[%s3 + $0x80] sm:$0xff]
    %v1403 = vld [vmem:[%s3 + $0x88] sm:$0xff]
    %v1404 = vld [vmem:[%s3 + $0x90] sm:$0xff]
    %v1405 = vld [vmem:[%s3 + $0x98] sm:$0xff]
    %v1406 = vld [vmem:[%s3 + $0xa0] sm:$0xff]
    %v1407 = vld [vmem:[%s3 + $0xa8] sm:$0xff]
    %v1408 = vld [vmem:[%s3 + $0xb0] sm:$0xff]
    %v1409 = vld [vmem:[%s3 + $0xb8] sm:$0xff]
    %v1410 = vld [vmem:[%s3 + $0xc0] sm:$0xff]
    %v1411 = vld [vmem:[%s3 + $0xc8] sm:$0xff]
    %v1412 = vld [vmem:[%s3 + $0xd0] sm:$0xff]
    %v1413 = vld [vmem:[%s3 + $0xd8] sm:$0xff]
    %v1414 = vld [vmem:[%s3 + $0xe0] sm:$0xff]
    %v1415 = vld [vmem:[%s3 + $0xe8] sm:$0xff]
    %v1416 = vld [vmem:[%s3 + $0xf0] sm:$0xff]
    %v1417 = vld [vmem:[%s3 + $0xf8] sm:$0xff]
    %v1418 = vld [vmem:[%s3 + $0x100] sm:$0xff]
    %v1419 = vld [vmem:[%s3 + $0x108] sm:$0xff]
    %v1420 = vld [vmem:[%s3 + $0x110] sm:$0xff]
    %v1421 = vld [vmem:[%s3 + $0x118] sm:$0xff]
    %v1422 = vld [vmem:[%s3 + $0x120] sm:$0xff]
    %v1423 = vld [vmem:[%s3 + $0x128] sm:$0xff]
    %v1424 = vld [vmem:[%s3 + $0x130] sm:$0xff]
    %v1425 = vld [vmem:[%s3 + $0x138] sm:$0xff]
    %v1426 = vld [vmem:[%s3 + $0x140] sm:$0xff]
    %v1427 = vld [vmem:[%s3 + $0x148] sm:$0xff]
    %v1428 = vld [vmem:[%s3 + $0x150] sm:$0xff]
    %v1429 = vld [vmem:[%s3 + $0x158] sm:$0xff]
    %v1430 = vld [vmem:[%s3 + $0x160] sm:$0xff]
    %v1431 = vld [vmem:[%s3 + $0x168] sm:$0xff]
    %v1432 = vld [vmem:[%s3 + $0x170] sm:$0xff]
    %v1433 = vld [vmem:[%s3 + $0x178] sm:$0xff]
    %v1434 = vld [vmem:[%s4] sm:$0x3]
    %v1436 = vlaneseq
    %v1437 = vshrl.u32 %v1436, 7
    %v1438 = vsub.s32 0, %v1437
    %v1439 = vrot.slane %v1434, %v1438
    %v1440 = vlaneseq
    %v1441 = vshrl.u32 %v1440, 7
    %v1442 = vsub.s32 1, %v1441
    %v1443 = vrot.slane %v1434, %v1442
    %v1494 = vunpack.c.l.b16 %v1386
    %v1495 = vunpack.c.h.b16 %v1386
    %v1496 = vunpack.c.l.b16 %v1387
    %v1497 = vunpack.c.h.b16 %v1387
    %v1498 = vunpack.c.l.b16 %v1388
    %v1499 = vunpack.c.h.b16 %v1388
    %v1500 = vunpack.c.l.b16 %v1389
    %v1501 = vunpack.c.h.b16 %v1389
    %v1502 = vunpack.c.l.b16 %v1390
    %v1503 = vunpack.c.h.b16 %v1390
    %v1504 = vunpack.c.l.b16 %v1391
    %v1505 = vunpack.c.h.b16 %v1391
    %v1506 = vunpack.c.l.b16 %v1392
    %v1507 = vunpack.c.h.b16 %v1392
    %v1508 = vunpack.c.l.b16 %v1393
    %v1509 = vunpack.c.h.b16 %v1393
    %v1510 = vunpack.c.l.b16 %v1394
    %v1511 = vunpack.c.h.b16 %v1394
    %v1512 = vunpack.c.l.b16 %v1395
    %v1513 = vunpack.c.h.b16 %v1395
    %v1514 = vunpack.c.l.b16 %v1396
    %v1515 = vunpack.c.h.b16 %v1396
    %v1516 = vunpack.c.l.b16 %v1397
    %v1517 = vunpack.c.h.b16 %v1397
    %v1518 = vunpack.c.l.b16 %v1398
    %v1519 = vunpack.c.h.b16 %v1398
    %v1520 = vunpack.c.l.b16 %v1399
    %v1521 = vunpack.c.h.b16 %v1399
    %v1522 = vunpack.c.l.b16 %v1400
    %v1523 = vunpack.c.h.b16 %v1400
    %v1524 = vunpack.c.l.b16 %v1401
    %v1525 = vunpack.c.h.b16 %v1401
    %v1526 = vunpack.c.l.b16 %v1402
    %v1527 = vunpack.c.h.b16 %v1402
    %v1528 = vunpack.c.l.b16 %v1403
    %v1529 = vunpack.c.h.b16 %v1403
    %v1530 = vunpack.c.l.b16 %v1404
    %v1531 = vunpack.c.h.b16 %v1404
    %v1532 = vunpack.c.l.b16 %v1405
    %v1533 = vunpack.c.h.b16 %v1405
    %v1534 = vunpack.c.l.b16 %v1406
    %v1535 = vunpack.c.h.b16 %v1406
    %v1536 = vunpack.c.l.b16 %v1407
    %v1537 = vunpack.c.h.b16 %v1407
    %v1538 = vunpack.c.l.b16 %v1408
    %v1539 = vunpack.c.h.b16 %v1408
    %v1540 = vunpack.c.l.b16 %v1409
    %v1541 = vunpack.c.h.b16 %v1409
    %v1542 = vunpack.c.l.b16 %v1410
    %v1543 = vunpack.c.h.b16 %v1410
    %v1544 = vunpack.c.l.b16 %v1411
    %v1545 = vunpack.c.h.b16 %v1411
    %v1546 = vunpack.c.l.b16 %v1412
    %v1547 = vunpack.c.h.b16 %v1412
    %v1548 = vunpack.c.l.b16 %v1413
    %v1549 = vunpack.c.h.b16 %v1413
    %v1550 = vunpack.c.l.b16 %v1414
    %v1551 = vunpack.c.h.b16 %v1414
    %v1552 = vunpack.c.l.b16 %v1415
    %v1553 = vunpack.c.h.b16 %v1415
    %v1554 = vunpack.c.l.b16 %v1416
    %v1555 = vunpack.c.h.b16 %v1416
    %v1556 = vunpack.c.l.b16 %v1417
    %v1557 = vunpack.c.h.b16 %v1417
    %v1558 = vunpack.c.l.b16 %v1418
    %v1559 = vunpack.c.h.b16 %v1418
    %v1560 = vunpack.c.l.b16 %v1419
    %v1561 = vunpack.c.h.b16 %v1419
    %v1562 = vunpack.c.l.b16 %v1420
    %v1563 = vunpack.c.h.b16 %v1420
    %v1564 = vunpack.c.l.b16 %v1421
    %v1565 = vunpack.c.h.b16 %v1421
    %v1566 = vunpack.c.l.b16 %v1422
    %v1567 = vunpack.c.h.b16 %v1422
    %v1568 = vunpack.c.l.b16 %v1423
    %v1569 = vunpack.c.h.b16 %v1423
    %v1570 = vunpack.c.l.b16 %v1424
    %v1571 = vunpack.c.h.b16 %v1424
    %v1572 = vunpack.c.l.b16 %v1425
    %v1573 = vunpack.c.h.b16 %v1425
    %v1574 = vunpack.c.l.b16 %v1426
    %v1575 = vunpack.c.h.b16 %v1426
    %v1576 = vunpack.c.l.b16 %v1427
    %v1577 = vunpack.c.h.b16 %v1427
    %v1578 = vunpack.c.l.b16 %v1428
    %v1579 = vunpack.c.h.b16 %v1428
    %v1580 = vunpack.c.l.b16 %v1429
    %v1581 = vunpack.c.h.b16 %v1429
    %v1582 = vunpack.c.l.b16 %v1430
    %v1583 = vunpack.c.h.b16 %v1430
    %v1584 = vunpack.c.l.b16 %v1431
    %v1585 = vunpack.c.h.b16 %v1431
    %v1586 = vunpack.c.l.b16 %v1432
    %v1587 = vunpack.c.h.b16 %v1432
    %v1588 = vunpack.c.l.b16 %v1433
    %v1589 = vunpack.c.h.b16 %v1433
    %v1590 = vpack.c.b16 %v1496, %v1494
    %v1591 = vpack.c.b16 %v1497, %v1495
    %v1592 = vpack.c.b16 %v1500, %v1498
    %v1593 = vpack.c.b16 %v1501, %v1499
    %v1594 = vpack.c.b16 %v1504, %v1502
    %v1595 = vpack.c.b16 %v1505, %v1503
    %v1596 = vpack.c.b16 %v1508, %v1506
    %v1597 = vpack.c.b16 %v1509, %v1507
    %v1598 = vpack.c.b16 %v1512, %v1510
    %v1599 = vpack.c.b16 %v1513, %v1511
    %v1600 = vpack.c.b16 %v1516, %v1514
    %v1601 = vpack.c.b16 %v1517, %v1515
    %v1602 = vpack.c.b16 %v1520, %v1518
    %v1603 = vpack.c.b16 %v1521, %v1519
    %v1604 = vpack.c.b16 %v1524, %v1522
    %v1605 = vpack.c.b16 %v1525, %v1523
    %v1606 = vpack.c.b16 %v1528, %v1526
    %v1607 = vpack.c.b16 %v1529, %v1527
    %v1608 = vpack.c.b16 %v1532, %v1530
    %v1609 = vpack.c.b16 %v1533, %v1531
    %v1610 = vpack.c.b16 %v1536, %v1534
    %v1611 = vpack.c.b16 %v1537, %v1535
    %v1612 = vpack.c.b16 %v1540, %v1538
    %v1613 = vpack.c.b16 %v1541, %v1539
    %v1614 = vpack.c.b16 %v1544, %v1542
    %v1615 = vpack.c.b16 %v1545, %v1543
    %v1616 = vpack.c.b16 %v1548, %v1546
    %v1617 = vpack.c.b16 %v1549, %v1547
    %v1618 = vpack.c.b16 %v1552, %v1550
    %v1619 = vpack.c.b16 %v1553, %v1551
    %v1620 = vpack.c.b16 %v1556, %v1554
    %v1621 = vpack.c.b16 %v1557, %v1555
    %v1622 = vpack.c.b16 %v1560, %v1558
    %v1623 = vpack.c.b16 %v1561, %v1559
    %v1624 = vpack.c.b16 %v1564, %v1562
    %v1625 = vpack.c.b16 %v1565, %v1563
    %v1626 = vpack.c.b16 %v1568, %v1566
    %v1627 = vpack.c.b16 %v1569, %v1567
    %v1628 = vpack.c.b16 %v1572, %v1570
    %v1629 = vpack.c.b16 %v1573, %v1571
    %v1630 = vpack.c.b16 %v1576, %v1574
    %v1631 = vpack.c.b16 %v1577, %v1575
    %v1632 = vpack.c.b16 %v1580, %v1578
    %v1633 = vpack.c.b16 %v1581, %v1579
    %v1634 = vpack.c.b16 %v1584, %v1582
    %v1635 = vpack.c.b16 %v1585, %v1583
    %v1636 = vpack.c.b16 %v1588, %v1586
    %v1637 = vpack.c.b16 %v1589, %v1587
    %1686 = vmatprep.subr.bf16.mxu0 %v1591
    %1687 = vmatpush1.bf16.msra.mxu0 %v1590
    %1688 = vmatprep.subr.bf16.mxu0 %v1593
    %1689 = vmatpush1.bf16.msra.mxu0 %v1592
    %1690 = vmatprep.subr.bf16.mxu0 %v1595
    %1691 = vmatpush1.bf16.msra.mxu0 %v1594
    %1692 = vmatprep.subr.bf16.mxu0 %v1597
    %1693 = vmatpush1.bf16.msra.mxu0 %v1596
    %1694 = vmatprep.subr.bf16.mxu0 %v1599
    %1695 = vmatpush1.bf16.msra.mxu0 %v1598
    %1696 = vmatprep.subr.bf16.mxu0 %v1601
    %1697 = vmatpush1.bf16.msra.mxu0 %v1600
    %1698 = vmatprep.subr.bf16.mxu0 %v1603
    %1699 = vmatpush1.bf16.msra.mxu0 %v1602
    %1700 = vmatprep.subr.bf16.mxu0 %v1605
    %1701 = vmatpush1.bf16.msra.mxu0 %v1604
    %1702 = vmatprep.subr.bf16.mxu0 %v1607
    %1703 = vmatpush1.bf16.msra.mxu0 %v1606
    %1704 = vmatprep.subr.bf16.mxu0 %v1609
    %1705 = vmatpush1.bf16.msra.mxu0 %v1608
    %1706 = vmatprep.subr.bf16.mxu0 %v1611
    %1707 = vmatpush1.bf16.msra.mxu0 %v1610
    %1708 = vmatprep.subr.bf16.mxu0 %v1613
    %1709 = vmatpush1.bf16.msra.mxu0 %v1612
    %1710 = vmatprep.subr.bf16.mxu0 %v1615
    %1711 = vmatpush1.bf16.msra.mxu0 %v1614
    %1712 = vmatprep.subr.bf16.mxu0 %v1617
    %1713 = vmatpush1.bf16.msra.mxu0 %v1616
    %1714 = vmatprep.subr.bf16.mxu0 %v1619
    %1715 = vmatpush1.bf16.msra.mxu0 %v1618
    %1716 = vmatprep.subr.bf16.mxu0 %v1621
    %1717 = vmatpush1.bf16.msra.mxu0 %v1620
    %1718 = vmatprep.mubr.bf16.mxu0 %v1384
    %1719 = vmatmul.mubr.bf16.gmra.mrb[0].mxu0 %v1383
    %v1720 = vpop.f32.mrb[0].mxu0
    %v1721 = vadd.f32 %v1439, %v1720
    %v1722 = vpop.f32.mrb[0].mxu0
    %v1723 = vadd.f32 %v1443, %v1722
    %v1724 = vpop.f32.mrb[0].mxu0
    %v1725 = vpop.f32.mrb[0].mxu0
    %1726 = vdwg.mxu0
    %1727 = vmatprep.subr.bf16.mxu0 %v1623
    %1728 = vmatpush1.bf16.msra.mxu0 %v1622
    %1729 = vmatprep.subr.bf16.mxu0 %v1625
    %1730 = vmatpush1.bf16.msra.mxu0 %v1624
    %1731 = vmatprep.subr.bf16.mxu0 %v1627
    %1732 = vmatpush1.bf16.msra.mxu0 %v1626
    %1733 = vmatprep.subr.bf16.mxu0 %v1629
    %1734 = vmatpush1.bf16.msra.mxu0 %v1628
    %1735 = vmatprep.subr.bf16.mxu0 %v1631
    %1736 = vmatpush1.bf16.msra.mxu0 %v1630
    %1737 = vmatprep.subr.bf16.mxu0 %v1633
    %1738 = vmatpush1.bf16.msra.mxu0 %v1632
    %1739 = vmatprep.subr.bf16.mxu0 %v1635
    %1740 = vmatpush1.bf16.msra.mxu0 %v1634
    %1741 = vmatprep.subr.bf16.mxu0 %v1637
    %1742 = vmatpush1.bf16.msra.mxu0 %v1636
    %1743 = vmatprep.subr.bf16.mxu0 0
    %1744 = vmatpush1.bf16.msra.mxu0 0
    %1745 = vmatprep.subr.bf16.mxu0 0
    %1746 = vmatpush1.bf16.msra.mxu0 0
    %1747 = vmatprep.subr.bf16.mxu0 0
    %1748 = vmatpush1.bf16.msra.mxu0 0
    %1749 = vmatprep.subr.bf16.mxu0 0
    %1750 = vmatpush1.bf16.msra.mxu0 0
    %1751 = vmatprep.subr.bf16.mxu0 0
    %1752 = vmatpush1.bf16.msra.mxu0 0
    %1753 = vmatprep.subr.bf16.mxu0 0
    %1754 = vmatpush1.bf16.msra.mxu0 0
    %1755 = vmatprep.subr.bf16.mxu0 0
    %1756 = vmatpush1.bf16.msra.mxu0 0
    %1757 = vmatprep.subr.bf16.mxu0 0
    %1758 = vmatpush1.bf16.msra.mxu0 0
    %1759 = vmatprep.mubr.bf16.mxu0 0
    %1760 = vmatmul.mubr.bf16.gmra.mrb[0].mxu0 %v1385
    %v1761 = vpop.f32.mrb[0].mxu0
    %v1762 = vadd.f32 %v1721, %v1761
    %v1763 = vpop.f32.mrb[0].mxu0
    %v1764 = vadd.f32 %v1723, %v1763
    %v1765 = vpop.f32.mrb[0].mxu0
    %v1766 = vpop.f32.mrb[0].mxu0
    %1767 = vdwg.mxu0
    %v1768 = vmax.f32 %v1762, 0.0
    %v1769 = vmax.f32 %v1764, 0.0
    %v1770 = vpack.c.bf16 %v1768, %v1768
    %v1771 = vpack.c.bf16 %v1769, %v1769
    %v1772 = vld [vmem:[%s5] sm:$0xf]
    %v1773 = vld [vmem:[%s5 + $0x4] sm:$0xf]
    %v1774 = vld [vmem:[%s5 + $0x8] sm:$0xf]
    %v1775 = vld [vmem:[%s5 + $0xc] sm:$0xf]
    %v1776 = vld [vmem:[%s5 + $0x10] sm:$0xf]
    %v1777 = vld [vmem:[%s5 + $0x14] sm:$0xf]
    %v1778 = vld [vmem:[%s5 + $0x18] sm:$0xf]
    %v1779 = vld [vmem:[%s5 + $0x1c] sm:$0xf]
    %v1780 = vld [vmem:[%s5 + $0x20] sm:$0xf]
    %v1781 = vld [vmem:[%s5 + $0x24] sm:$0xf]
    %v1782 = vld [vmem:[%s5 + $0x28] sm:$0xf]
    %v1783 = vld [vmem:[%s5 + $0x2c] sm:$0xf]
    %v1784 = vld [vmem:[%s5 + $0x30] sm:$0xf]
    %v1785 = vld [vmem:[%s5 + $0x34] sm:$0xf]
    %v1786 = vld [vmem:[%s5 + $0x38] sm:$0xf]
    %v1787 = vld [vmem:[%s5 + $0x3c] sm:$0xf]
    %v1788 = vld [vmem:[%s5 + $0x40] sm:$0xf]
    %v1789 = vld [vmem:[%s5 + $0x44] sm:$0xf]
    %v1790 = vld [vmem:[%s5 + $0x48] sm:$0xf]
    %v1791 = vld [vmem:[%s5 + $0x4c] sm:$0xf]
    %v1792 = vld [vmem:[%s5 + $0x50] sm:$0xf]
    %v1793 = vld [vmem:[%s5 + $0x54] sm:$0xf]
    %v1794 = vld [vmem:[%s5 + $0x58] sm:$0xf]
    %v1795 = vld [vmem:[%s5 + $0x5c] sm:$0xf]
    %v1796 = vld [vmem:[%s5 + $0x60] sm:$0xf]
    %v1797 = vld [vmem:[%s5 + $0x64] sm:$0xf]
    %v1798 = vld [vmem:[%s5 + $0x68] sm:$0xf]
    %v1799 = vld [vmem:[%s5 + $0x6c] sm:$0xf]
    %v1800 = vld [vmem:[%s5 + $0x70] sm:$0xf]
    %v1801 = vld [vmem:[%s5 + $0x74] sm:$0xf]
    %v1802 = vld [vmem:[%s5 + $0x78] sm:$0xf]
    %v1803 = vld [vmem:[%s5 + $0x7c] sm:$0xf]
    %v1804 = vld [vmem:[%s6] sm:$0x1]
    %v1806 = vlaneseq
    %v1807 = vshrl.u32 %v1806, 7
    %v1808 = vsub.s32 0, %v1807
    %v1809 = vrot.slane %v1804, %v1808
    %v1843 = vunpack.c.l.b16 %v1772
    %v1844 = vunpack.c.l.b16 %v1773
    %v1845 = vunpack.c.l.b16 %v1774
    %v1846 = vunpack.c.l.b16 %v1775
    %v1847 = vunpack.c.l.b16 %v1776
    %v1848 = vunpack.c.l.b16 %v1777
    %v1849 = vunpack.c.l.b16 %v1778
    %v1850 = vunpack.c.l.b16 %v1779
    %v1851 = vunpack.c.l.b16 %v1780
    %v1852 = vunpack.c.l.b16 %v1781
    %v1853 = vunpack.c.l.b16 %v1782
    %v1854 = vunpack.c.l.b16 %v1783
    %v1855 = vunpack.c.l.b16 %v1784
    %v1856 = vunpack.c.l.b16 %v1785
    %v1857 = vunpack.c.l.b16 %v1786
    %v1858 = vunpack.c.l.b16 %v1787
    %v1859 = vunpack.c.l.b16 %v1788
    %v1860 = vunpack.c.l.b16 %v1789
    %v1861 = vunpack.c.l.b16 %v1790
    %v1862 = vunpack.c.l.b16 %v1791
    %v1863 = vunpack.c.l.b16 %v1792
    %v1864 = vunpack.c.l.b16 %v1793
    %v1865 = vunpack.c.l.b16 %v1794
    %v1866 = vunpack.c.l.b16 %v1795
    %v1867 = vunpack.c.l.b16 %v1796
    %v1868 = vunpack.c.l.b16 %v1797
    %v1869 = vunpack.c.l.b16 %v1798
    %v1870 = vunpack.c.l.b16 %v1799
    %v1871 = vunpack.c.l.b16 %v1800
    %v1872 = vunpack.c.l.b16 %v1801
    %v1873 = vunpack.c.l.b16 %v1802
    %v1874 = vunpack.c.l.b16 %v1803
    %v1875 = vpack.c.b16 %v1844, %v1843
    %v1876 = vpack.c.b16 %v1846, %v1845
    %v1877 = vpack.c.b16 %v1848, %v1847
    %v1878 = vpack.c.b16 %v1850, %v1849
    %v1879 = vpack.c.b16 %v1852, %v1851
    %v1880 = vpack.c.b16 %v1854, %v1853
    %v1881 = vpack.c.b16 %v1856, %v1855
    %v1882 = vpack.c.b16 %v1858, %v1857
    %v1883 = vpack.c.b16 %v1860, %v1859
    %v1884 = vpack.c.b16 %v1862, %v1861
    %v1885 = vpack.c.b16 %v1864, %v1863
    %v1886 = vpack.c.b16 %v1866, %v1865
    %v1887 = vpack.c.b16 %v1868, %v1867
    %v1888 = vpack.c.b16 %v1870, %v1869
    %v1889 = vpack.c.b16 %v1872, %v1871
    %v1890 = vpack.c.b16 %v1874, %v1873
    %1907 = vmatprep.subr.bf16.mxu0 0
    %1908 = vmatpush1.bf16.msra.mxu0 %v1875
    %1909 = vmatprep.subr.bf16.mxu0 0
    %1910 = vmatpush1.bf16.msra.mxu0 %v1876
    %1911 = vmatprep.subr.bf16.mxu0 0
    %1912 = vmatpush1.bf16.msra.mxu0 %v1877
    %1913 = vmatprep.subr.bf16.mxu0 0
    %1914 = vmatpush1.bf16.msra.mxu0 %v1878
    %1915 = vmatprep.subr.bf16.mxu0 0
    %1916 = vmatpush1.bf16.msra.mxu0 %v1879
    %1917 = vmatprep.subr.bf16.mxu0 0
    %1918 = vmatpush1.bf16.msra.mxu0 %v1880
    %1919 = vmatprep.subr.bf16.mxu0 0
    %1920 = vmatpush1.bf16.msra.mxu0 %v1881
    %1921 = vmatprep.subr.bf16.mxu0 0
    %1922 = vmatpush1.bf16.msra.mxu0 %v1882
    %1923 = vmatprep.subr.bf16.mxu0 0
    %1924 = vmatpush1.bf16.msra.mxu0 %v1883
    %1925 = vmatprep.subr.bf16.mxu0 0
    %1926 = vmatpush1.bf16.msra.mxu0 %v1884
    %1927 = vmatprep.subr.bf16.mxu0 0
    %1928 = vmatpush1.bf16.msra.mxu0 %v1885
    %1929 = vmatprep.subr.bf16.mxu0 0
    %1930 = vmatpush1.bf16.msra.mxu0 %v1886
    %1931 = vmatprep.subr.bf16.mxu0 0
    %1932 = vmatpush1.bf16.msra.mxu0 %v1887
    %1933 = vmatprep.subr.bf16.mxu0 0
    %1934 = vmatpush1.bf16.msra.mxu0 %v1888
    %1935 = vmatprep.subr.bf16.mxu0 0
    %1936 = vmatpush1.bf16.msra.mxu0 %v1889
    %1937 = vmatprep.subr.bf16.mxu0 0
    %1938 = vmatpush1.bf16.msra.mxu0 %v1890
    %1939 = vmatprep.mubr.bf16.mxu0 %v1771
    %1940 = vmatmul.mubr.bf16.gmra.mrb[0].mxu0 %v1770
    %v1941 = vpop.f32.mrb[0].mxu0
    %v1942 = vadd.f32 %v1809, %v1941
    %v1943 = vpop.f32.mrb[0].mxu0
    %v1944 = vpop.f32.mrb[0].mxu0
    %v1945 = vpop.f32.mrb[0].mxu0
    %1946 = vdwg.mxu0
    %v1947 = vpack.c.bf16 %v1942, %v1942
    %1948 = vst [vmem:[%s7] sm:$0xf] %v1947
    // Predicated region
    $region34: #{neural_network_forward.1} parent=1 // pred_check
      _
    $region35: #{neural_network_forward.1} parent=1 // pred_check_branch
      %1950 = sbr.rel (0) target = $region37
    $region36: #{neural_network_forward.1} parent=1 // pred_region
      _
    $region37: #{neural_network_forward.1} parent=1 // pred_fallthru
      _
    // Predicated region
    $region38: #{neural_network_forward.1} parent=1 // pred_check
      _
    $region39: #{neural_network_forward.1} parent=1 // pred_check_branch
      %1952 = sbr.rel (0) target = $region41
    $region40: #{neural_network_forward.1} parent=1 // pred_region
      _
    $region41: #{neural_network_forward.1} parent=1 // pred_fallthru
      _
    %1953 = vsyncpa [#allocation3], 1

</llo_original>
